<compile_context>
chip_gen: v6e
topology: v6e:2x2x1
jax: 0.10.0
libtpu: 0.0.40
codegen_flags: <defaults>
</compile_context>

<pallas_src>
import functools

import jax
import jax.numpy as jnp
from jax import lax
from jax.experimental import pallas as pl
from jax.experimental.pallas import tpu as pltpu


# ----------------------------- fused kernel ------------------------------------------------------

def _fused_head_kernel(x_ref, w_ref, ryi_ref, rxit_ref, border_ref, o_ref,
                       p_ref, tmp_ref, *, C, K, KG, H, W, Hout, Wout):
    # x_ref:      [1, C, H, W]          (VMEM, f32)  one image, NCHW
    # w_ref:      [K, C]                (SMEM, f32)  1x1 conv weights (scalar reads)
    # ryi_ref:    [Hout, H]             (VMEM, f32)  row-resize matrix, interior columns
    # rxit_ref:   [W, Wout]             (VMEM, f32)  col-resize matrix, interior columns, transposed
    # border_ref: [Hout, Wout]          (VMEM, f32)  constant contribution of the 1/K padded ring
    # o_ref:      [1, KG*Hout, Wout]    (VMEM, f32)  one channel-group slab of the flattened output
    # p_ref:      [K, H, W]             (VMEM, f32)  scratch: softmax probabilities
    # tmp_ref:    [KG*Hout, W]          (VMEM, f32)  scratch: stacked first-matmul results
    g = pl.program_id(1)  # channel group index

    # ---- 1x1 conv (no bias): K weighted sums of the C input planes (VPU) ----
    logits = []
    for k in range(K):
        acc = w_ref[k, 0] * x_ref[0, 0]
        for c in range(1, C):
            acc = acc + w_ref[k, c] * x_ref[0, c]
        logits.append(acc)                                         # [H, W] f32

    # ---- Softmax2d: per-pixel softmax over the K planes (f32, exact divide) ----
    m = logits[0]
    for k in range(1, K):
        m = jnp.maximum(m, logits[k])
    exps = [jnp.exp(l - m) for l in logits]
    denom = exps[0]
    for k in range(1, K):
        denom = denom + exps[k]
    inv = 1.0 / denom
    for k in range(K):
        p_ref[k] = exps[k] * inv                                   # [H, W]

    # ---- bilinear resize of this channel group's prob planes ----
    # First matmul per channel (contraction H), stacked channel-major into the
    # [KG*Hout, W] scratch; row offsets kk*Hout are multiples of 8 (f32 tiles).
    ryi = ryi_ref[...]                                             # [Hout, H]
    for kk in range(KG):
        p = p_ref[g * KG + kk]                                     # dynamic leading-dim read
        tmp_ref[kk * Hout:(kk + 1) * Hout, :] = jnp.dot(
            ryi, p, preferred_element_type=jnp.float32)            # [Hout, W]

    # Second matmul batched over the KG channels: RHS pushed into MXU weight
    # regs once and reused over all KG*Hout LHS rows.
    big = jnp.dot(tmp_ref[...], rxit_ref[...],
                  preferred_element_type=jnp.float32)              # [KG*Hout, Wout]

    # Add the constant border via a broadcast view (no jnp.tile materialization),
    # then one contiguous lane-dense slab store.
    res = big.reshape(KG, Hout, Wout) + border_ref[...][None, :, :]
    o_ref[0] = res.reshape(KG * Hout, Wout)


# ----------------------------- host-side constants ------------------------------------------------

def _resize_matrix(out_size, in_size):
    # PyTorch F.interpolate(mode='bilinear', align_corners=False) source-index rule.
    scale = in_size / out_size
    i = jnp.arange(out_size, dtype=jnp.float32)
    src = jnp.maximum((i + 0.5) * scale - 0.5, 0.0)
    i0f = jnp.floor(src)
    lam1 = src - i0f
    i0 = i0f.astype(jnp.int32)
    i1 = jnp.minimum(i0 + 1, in_size - 1)
    lam0 = 1.0 - lam1
    rows = jnp.arange(out_size)
    r = jnp.zeros((out_size, in_size), jnp.float32)
    r = r.at[rows, i0].add(lam0)
    r = r.at[rows, i1].add(lam1)
    return r


def segmentation_head_forward(x, w2d, out_hw=(200, 200), channel_split=None):
    # x: [N, C, H, W] f32 (NCHW); w2d: [K, C] f32 (Conv2d 1x1 weight squeezed).
    N, C, H, W = x.shape
    K = w2d.shape[0]
    Hout, Wout = out_hw

    if channel_split is None:
        # >=2 steps/image so both v7x TensorCores get work at N=2 and the output
        # writeback overlaps the next step; near-neutral on single-TC v5e/v6e.
        channel_split = 2 if (K % 2 == 0) else 1
    G = channel_split
    assert K % G == 0, "channel_split must divide K"
    KG = K // G

    # Bilinear matrices for the padded (H+2, W+2) -> (Hout, Wout) resize.
    ry_full = _resize_matrix(Hout, H + 2)                          # [Hout, H+2]
    rx_full = _resize_matrix(Wout, W + 2)                          # [Wout, W+2]
    ryi = ry_full[:, 1:H + 1]                                      # [Hout, H]  f32
    rxit = rx_full[:, 1:W + 1].T                                   # [W, Wout]  f32
    # Constant image contributed by the 1/K border ring of the padded softmax output.
    ring = jnp.ones((H + 2, W + 2), jnp.float32).at[1:H + 1, 1:W + 1].set(0.0)
    border = jnp.einsum('ai,ij,bj->ab', ry_full, ring, rx_full,
                        precision=lax.Precision.HIGHEST) / float(K)  # [Hout, Wout]

    kernel = functools.partial(_fused_head_kernel, C=C, K=K, KG=KG,
                               H=H, W=W, Hout=Hout, Wout=Wout)
    out_flat = pl.pallas_call(
        kernel,
        out_shape=jax.ShapeDtypeStruct((N, K * Hout, Wout), jnp.float32),
        grid_spec=pltpu.PrefetchScalarGridSpec(
            num_scalar_prefetch=0,
            grid=(N, G),
            in_specs=[
                pl.BlockSpec((1, C, H, W), lambda n, g: (n, 0, 0, 0)),
                pl.BlockSpec(memory_space=pltpu.MemorySpace.SMEM),   # conv weights -> SMEM scalars
                pl.BlockSpec((Hout, H), lambda n, g: (0, 0)),
                pl.BlockSpec((W, Wout), lambda n, g: (0, 0)),
                pl.BlockSpec((Hout, Wout), lambda n, g: (0, 0)),
            ],
            out_specs=pl.BlockSpec((1, KG * Hout, Wout), lambda n, g: (n, g, 0)),
            scratch_shapes=[
                pltpu.VMEM((K, H, W), jnp.float32),        # softmax probabilities
                pltpu.VMEM((KG * Hout, W), jnp.float32),   # stacked first-matmul results
            ],
        ),
        compiler_params=pltpu.CompilerParams(
            dimension_semantics=("parallel", "parallel")),
    )(x, w2d, ryi, rxit, border)

    # Free, contiguous reshape of the channel-major slab back to NCHW.
    return out_flat.reshape(N, K, Hout, Wout)


# ----------------------------- pure-JAX reference (for the sanity check) --------------------------

def _reference_forward(x, w2d, out_hw=(200, 200)):
    N, C, H, W = x.shape
    Hout, Wout = out_hw
    logits = jnp.einsum('nchw,kc->nkhw', x, w2d, precision=lax.Precision.HIGHEST)
    logits = jnp.pad(logits, ((0, 0), (0, 0), (1, 1), (1, 1)))     # zero-pad ring (bias=False)
    probs = jax.nn.softmax(logits, axis=1)
    ry = _resize_matrix(Hout, H + 2)
    rx = _resize_matrix(Wout, W + 2)
    return jnp.einsum('ai,nkij,bj->nkab', ry, probs, rx,
                      precision=lax.Precision.HIGHEST)


# ----------------------------- module wrapper ----------------------------------------------------

class SegmentationNet10aHeadPallas:
    def __init__(self, output_k, cfg, key):
        self.cfg = cfg
        self.num_features = cfg[-1][0]
        self.output_k = output_k
        self.num_sub_heads = 1
        self.input_sz = (200, 200)
        # Conv2d weight [K, C, 1, 1], deterministic uniform init (kaiming-uniform-like bound).
        fan_in = float(self.num_features)
        bound = (1.0 / fan_in) ** 0.5
        self.weights = []
        for i in range(self.num_sub_heads):
            k = jax.random.fold_in(key, i)
            w = jax.random.uniform(k, (output_k, self.num_features, 1, 1),
                                   jnp.float32, -bound, bound)
            self.weights.append(w)

    def __call__(self, x):
        # x: NCHW [N, C, H, W] -> list of [N, K, 200, 200]
        results = []
        for w in self.weights:
            w2d = w[:, :, 0, 0]                                    # [K, C]
            results.append(segmentation_head_forward(x, w2d, self.input_sz))
        return results


if __name__ == "__main__":
    key = jax.random.PRNGKey(0)
    cfg = [(64, 1), (8, 1)]          # cfg[-1][0] = num_features = 8
    output_k = 4
    model = SegmentationNet10aHeadPallas(output_k, cfg, jax.random.fold_in(key, 1))

    x = jax.random.normal(jax.random.fold_in(key, 2), (2, 8, 16, 16), jnp.float32)  # NCHW
    results = model(x)
    for r in results:
        jax.block_until_ready(r)

    assert len(results) == 1
    r0 = results[0]
    assert r0.shape == (2, output_k, 200, 200)
    assert r0.dtype == jnp.float32

    # sanity: values are (near-)probabilities and the padded border resizes to uniform 1/K
    assert bool(jnp.all(r0 >= -1e-2)) and bool(jnp.all(r0 <= 1.05))
    assert bool(jnp.allclose(r0[:, :, 0, 0], 1.0 / output_k, atol=1e-2))

    # full numerical check against a pure-JAX reference of the PyTorch head
    ref = _reference_forward(x, model.weights[0][:, :, 0, 0], model.input_sz)
    jax.block_until_ready(ref)
    assert bool(jnp.allclose(r0, ref, atol=5e-3)), float(jnp.max(jnp.abs(r0 - ref)))

    print("KERNEL_OK")
</pallas_src>

<mosaic_0001>
module attributes {stable_mosaic.version = 11 : i64} {
  func.func @_fused_head_kernel(%arg0: i32, %arg1: i32, %arg2: memref<1x8x16x16xf32, #tpu.memory_space<vmem>>, %arg3: memref<4x8xf32, #tpu.memory_space<smem>>, %arg4: memref<200x16xf32, #tpu.memory_space<vmem>>, %arg5: memref<16x200xf32, #tpu.memory_space<vmem>>, %arg6: memref<200x200xf32, #tpu.memory_space<vmem>>, %arg7: memref<1x400x200xf32, #tpu.memory_space<vmem>>, %arg8: memref<4x16x16xf32, #tpu.memory_space<vmem>>, %arg9: memref<400x16xf32, #tpu.memory_space<vmem>>) attributes {dimension_semantics = [#tpu.dimension_semantics<parallel>, #tpu.dimension_semantics<parallel>], iteration_bounds = array<i64: 2, 2>, scalar_prefetch = 0 : i64, scratch_operands = 2 : i64, tpu.core_type = #tpu.core_type<tc>, window_params = [{transform_indices = @transform_0, window_bounds = array<i64: 1, 8, 16, 16>}, {transform_indices = @transform_1, window_bounds = array<i64: 4, 8>}, {pipeline_mode = #tpu.pipeline_mode<synchronous>, transform_indices = @transform_2, window_bounds = array<i64: 200, 16>}, {pipeline_mode = #tpu.pipeline_mode<synchronous>, transform_indices = @transform_3, window_bounds = array<i64: 16, 200>}, {pipeline_mode = #tpu.pipeline_mode<synchronous>, transform_indices = @transform_4, window_bounds = array<i64: 200, 200>}, {transform_indices = @transform_5, window_bounds = array<i64: 1, 400, 200>}]} {
    %c0 = arith.constant 0 : index
    %c0_0 = arith.constant 0 : index
    %0 = memref.load %arg3[%c0, %c0_0] : memref<4x8xf32, #tpu.memory_space<smem>>
    %c0_1 = arith.constant 0 : index
    %c0_2 = arith.constant 0 : index
    %c0_3 = arith.constant 0 : index
    %c0_4 = arith.constant 0 : index
    %1 = vector.load %arg2[%c0_1, %c0_2, %c0_3, %c0_4] : memref<1x8x16x16xf32, #tpu.memory_space<vmem>>, vector<1x1x16x16xf32>
    %2 = vector.shape_cast %1 : vector<1x1x16x16xf32> to vector<16x16xf32>
    %3 = vector.broadcast %0 : f32 to vector<16x16xf32>
    %4 = arith.mulf %3, %2 : vector<16x16xf32>
    %c0_5 = arith.constant 0 : index
    %c1 = arith.constant 1 : index
    %5 = memref.load %arg3[%c0_5, %c1] : memref<4x8xf32, #tpu.memory_space<smem>>
    %c0_6 = arith.constant 0 : index
    %c1_7 = arith.constant 1 : index
    %c0_8 = arith.constant 0 : index
    %c0_9 = arith.constant 0 : index
    %6 = vector.load %arg2[%c0_6, %c1_7, %c0_8, %c0_9] : memref<1x8x16x16xf32, #tpu.memory_space<vmem>>, vector<1x1x16x16xf32>
    %7 = vector.shape_cast %6 : vector<1x1x16x16xf32> to vector<16x16xf32>
    %8 = vector.broadcast %5 : f32 to vector<16x16xf32>
    %9 = arith.mulf %8, %7 : vector<16x16xf32>
    %10 = arith.addf %4, %9 : vector<16x16xf32>
    %c0_10 = arith.constant 0 : index
    %c2 = arith.constant 2 : index
    %11 = memref.load %arg3[%c0_10, %c2] : memref<4x8xf32, #tpu.memory_space<smem>>
    %c0_11 = arith.constant 0 : index
    %c2_12 = arith.constant 2 : index
    %c0_13 = arith.constant 0 : index
    %c0_14 = arith.constant 0 : index
    %12 = vector.load %arg2[%c0_11, %c2_12, %c0_13, %c0_14] : memref<1x8x16x16xf32, #tpu.memory_space<vmem>>, vector<1x1x16x16xf32>
    %13 = vector.shape_cast %12 : vector<1x1x16x16xf32> to vector<16x16xf32>
    %14 = vector.broadcast %11 : f32 to vector<16x16xf32>
    %15 = arith.mulf %14, %13 : vector<16x16xf32>
    %16 = arith.addf %10, %15 : vector<16x16xf32>
    %c0_15 = arith.constant 0 : index
    %c3 = arith.constant 3 : index
    %17 = memref.load %arg3[%c0_15, %c3] : memref<4x8xf32, #tpu.memory_space<smem>>
    %c0_16 = arith.constant 0 : index
    %c3_17 = arith.constant 3 : index
    %c0_18 = arith.constant 0 : index
    %c0_19 = arith.constant 0 : index
    %18 = vector.load %arg2[%c0_16, %c3_17, %c0_18, %c0_19] : memref<1x8x16x16xf32, #tpu.memory_space<vmem>>, vector<1x1x16x16xf32>
    %19 = vector.shape_cast %18 : vector<1x1x16x16xf32> to vector<16x16xf32>
    %20 = vector.broadcast %17 : f32 to vector<16x16xf32>
    %21 = arith.mulf %20, %19 : vector<16x16xf32>
    %22 = arith.addf %16, %21 : vector<16x16xf32>
    %c0_20 = arith.constant 0 : index
    %c4 = arith.constant 4 : index
    %23 = memref.load %arg3[%c0_20, %c4] : memref<4x8xf32, #tpu.memory_space<smem>>
    %c0_21 = arith.constant 0 : index
    %c4_22 = arith.constant 4 : index
    %c0_23 = arith.constant 0 : index
    %c0_24 = arith.constant 0 : index
    %24 = vector.load %arg2[%c0_21, %c4_22, %c0_23, %c0_24] : memref<1x8x16x16xf32, #tpu.memory_space<vmem>>, vector<1x1x16x16xf32>
    %25 = vector.shape_cast %24 : vector<1x1x16x16xf32> to vector<16x16xf32>
    %26 = vector.broadcast %23 : f32 to vector<16x16xf32>
    %27 = arith.mulf %26, %25 : vector<16x16xf32>
    %28 = arith.addf %22, %27 : vector<16x16xf32>
    %c0_25 = arith.constant 0 : index
    %c5 = arith.constant 5 : index
    %29 = memref.load %arg3[%c0_25, %c5] : memref<4x8xf32, #tpu.memory_space<smem>>
    %c0_26 = arith.constant 0 : index
    %c5_27 = arith.constant 5 : index
    %c0_28 = arith.constant 0 : index
    %c0_29 = arith.constant 0 : index
    %30 = vector.load %arg2[%c0_26, %c5_27, %c0_28, %c0_29] : memref<1x8x16x16xf32, #tpu.memory_space<vmem>>, vector<1x1x16x16xf32>
    %31 = vector.shape_cast %30 : vector<1x1x16x16xf32> to vector<16x16xf32>
    %32 = vector.broadcast %29 : f32 to vector<16x16xf32>
    %33 = arith.mulf %32, %31 : vector<16x16xf32>
    %34 = arith.addf %28, %33 : vector<16x16xf32>
    %c0_30 = arith.constant 0 : index
    %c6 = arith.constant 6 : index
    %35 = memref.load %arg3[%c0_30, %c6] : memref<4x8xf32, #tpu.memory_space<smem>>
    %c0_31 = arith.constant 0 : index
    %c6_32 = arith.constant 6 : index
    %c0_33 = arith.constant 0 : index
    %c0_34 = arith.constant 0 : index
    %36 = vector.load %arg2[%c0_31, %c6_32, %c0_33, %c0_34] : memref<1x8x16x16xf32, #tpu.memory_space<vmem>>, vector<1x1x16x16xf32>
    %37 = vector.shape_cast %36 : vector<1x1x16x16xf32> to vector<16x16xf32>
    %38 = vector.broadcast %35 : f32 to vector<16x16xf32>
    %39 = arith.mulf %38, %37 : vector<16x16xf32>
    %40 = arith.addf %34, %39 : vector<16x16xf32>
    %c0_35 = arith.constant 0 : index
    %c7 = arith.constant 7 : index
    %41 = memref.load %arg3[%c0_35, %c7] : memref<4x8xf32, #tpu.memory_space<smem>>
    %c0_36 = arith.constant 0 : index
    %c7_37 = arith.constant 7 : index
    %c0_38 = arith.constant 0 : index
    %c0_39 = arith.constant 0 : index
    %42 = vector.load %arg2[%c0_36, %c7_37, %c0_38, %c0_39] : memref<1x8x16x16xf32, #tpu.memory_space<vmem>>, vector<1x1x16x16xf32>
    %43 = vector.shape_cast %42 : vector<1x1x16x16xf32> to vector<16x16xf32>
    %44 = vector.broadcast %41 : f32 to vector<16x16xf32>
    %45 = arith.mulf %44, %43 : vector<16x16xf32>
    %46 = arith.addf %40, %45 : vector<16x16xf32>
    %c1_40 = arith.constant 1 : index
    %c0_41 = arith.constant 0 : index
    %47 = memref.load %arg3[%c1_40, %c0_41] : memref<4x8xf32, #tpu.memory_space<smem>>
    %c0_42 = arith.constant 0 : index
    %c0_43 = arith.constant 0 : index
    %c0_44 = arith.constant 0 : index
    %c0_45 = arith.constant 0 : index
    %48 = vector.load %arg2[%c0_42, %c0_43, %c0_44, %c0_45] : memref<1x8x16x16xf32, #tpu.memory_space<vmem>>, vector<1x1x16x16xf32>
    %49 = vector.shape_cast %48 : vector<1x1x16x16xf32> to vector<16x16xf32>
    %50 = vector.broadcast %47 : f32 to vector<16x16xf32>
    %51 = arith.mulf %50, %49 : vector<16x16xf32>
    %c1_46 = arith.constant 1 : index
    %c1_47 = arith.constant 1 : index
    %52 = memref.load %arg3[%c1_46, %c1_47] : memref<4x8xf32, #tpu.memory_space<smem>>
    %c0_48 = arith.constant 0 : index
    %c1_49 = arith.constant 1 : index
    %c0_50 = arith.constant 0 : index
    %c0_51 = arith.constant 0 : index
    %53 = vector.load %arg2[%c0_48, %c1_49, %c0_50, %c0_51] : memref<1x8x16x16xf32, #tpu.memory_space<vmem>>, vector<1x1x16x16xf32>
    %54 = vector.shape_cast %53 : vector<1x1x16x16xf32> to vector<16x16xf32>
    %55 = vector.broadcast %52 : f32 to vector<16x16xf32>
    %56 = arith.mulf %55, %54 : vector<16x16xf32>
    %57 = arith.addf %51, %56 : vector<16x16xf32>
    %c1_52 = arith.constant 1 : index
    %c2_53 = arith.constant 2 : index
    %58 = memref.load %arg3[%c1_52, %c2_53] : memref<4x8xf32, #tpu.memory_space<smem>>
    %c0_54 = arith.constant 0 : index
    %c2_55 = arith.constant 2 : index
    %c0_56 = arith.constant 0 : index
    %c0_57 = arith.constant 0 : index
    %59 = vector.load %arg2[%c0_54, %c2_55, %c0_56, %c0_57] : memref<1x8x16x16xf32, #tpu.memory_space<vmem>>, vector<1x1x16x16xf32>
    %60 = vector.shape_cast %59 : vector<1x1x16x16xf32> to vector<16x16xf32>
    %61 = vector.broadcast %58 : f32 to vector<16x16xf32>
    %62 = arith.mulf %61, %60 : vector<16x16xf32>
    %63 = arith.addf %57, %62 : vector<16x16xf32>
    %c1_58 = arith.constant 1 : index
    %c3_59 = arith.constant 3 : index
    %64 = memref.load %arg3[%c1_58, %c3_59] : memref<4x8xf32, #tpu.memory_space<smem>>
    %c0_60 = arith.constant 0 : index
    %c3_61 = arith.constant 3 : index
    %c0_62 = arith.constant 0 : index
    %c0_63 = arith.constant 0 : index
    %65 = vector.load %arg2[%c0_60, %c3_61, %c0_62, %c0_63] : memref<1x8x16x16xf32, #tpu.memory_space<vmem>>, vector<1x1x16x16xf32>
    %66 = vector.shape_cast %65 : vector<1x1x16x16xf32> to vector<16x16xf32>
    %67 = vector.broadcast %64 : f32 to vector<16x16xf32>
    %68 = arith.mulf %67, %66 : vector<16x16xf32>
    %69 = arith.addf %63, %68 : vector<16x16xf32>
    %c1_64 = arith.constant 1 : index
    %c4_65 = arith.constant 4 : index
    %70 = memref.load %arg3[%c1_64, %c4_65] : memref<4x8xf32, #tpu.memory_space<smem>>
    %c0_66 = arith.constant 0 : index
    %c4_67 = arith.constant 4 : index
    %c0_68 = arith.constant 0 : index
    %c0_69 = arith.constant 0 : index
    %71 = vector.load %arg2[%c0_66, %c4_67, %c0_68, %c0_69] : memref<1x8x16x16xf32, #tpu.memory_space<vmem>>, vector<1x1x16x16xf32>
    %72 = vector.shape_cast %71 : vector<1x1x16x16xf32> to vector<16x16xf32>
    %73 = vector.broadcast %70 : f32 to vector<16x16xf32>
    %74 = arith.mulf %73, %72 : vector<16x16xf32>
    %75 = arith.addf %69, %74 : vector<16x16xf32>
    %c1_70 = arith.constant 1 : index
    %c5_71 = arith.constant 5 : index
    %76 = memref.load %arg3[%c1_70, %c5_71] : memref<4x8xf32, #tpu.memory_space<smem>>
    %c0_72 = arith.constant 0 : index
    %c5_73 = arith.constant 5 : index
    %c0_74 = arith.constant 0 : index
    %c0_75 = arith.constant 0 : index
    %77 = vector.load %arg2[%c0_72, %c5_73, %c0_74, %c0_75] : memref<1x8x16x16xf32, #tpu.memory_space<vmem>>, vector<1x1x16x16xf32>
    %78 = vector.shape_cast %77 : vector<1x1x16x16xf32> to vector<16x16xf32>
    %79 = vector.broadcast %76 : f32 to vector<16x16xf32>
    %80 = arith.mulf %79, %78 : vector<16x16xf32>
    %81 = arith.addf %75, %80 : vector<16x16xf32>
    %c1_76 = arith.constant 1 : index
    %c6_77 = arith.constant 6 : index
    %82 = memref.load %arg3[%c1_76, %c6_77] : memref<4x8xf32, #tpu.memory_space<smem>>
    %c0_78 = arith.constant 0 : index
    %c6_79 = arith.constant 6 : index
    %c0_80 = arith.constant 0 : index
    %c0_81 = arith.constant 0 : index
    %83 = vector.load %arg2[%c0_78, %c6_79, %c0_80, %c0_81] : memref<1x8x16x16xf32, #tpu.memory_space<vmem>>, vector<1x1x16x16xf32>
    %84 = vector.shape_cast %83 : vector<1x1x16x16xf32> to vector<16x16xf32>
    %85 = vector.broadcast %82 : f32 to vector<16x16xf32>
    %86 = arith.mulf %85, %84 : vector<16x16xf32>
    %87 = arith.addf %81, %86 : vector<16x16xf32>
    %c1_82 = arith.constant 1 : index
    %c7_83 = arith.constant 7 : index
    %88 = memref.load %arg3[%c1_82, %c7_83] : memref<4x8xf32, #tpu.memory_space<smem>>
    %c0_84 = arith.constant 0 : index
    %c7_85 = arith.constant 7 : index
    %c0_86 = arith.constant 0 : index
    %c0_87 = arith.constant 0 : index
    %89 = vector.load %arg2[%c0_84, %c7_85, %c0_86, %c0_87] : memref<1x8x16x16xf32, #tpu.memory_space<vmem>>, vector<1x1x16x16xf32>
    %90 = vector.shape_cast %89 : vector<1x1x16x16xf32> to vector<16x16xf32>
    %91 = vector.broadcast %88 : f32 to vector<16x16xf32>
    %92 = arith.mulf %91, %90 : vector<16x16xf32>
    %93 = arith.addf %87, %92 : vector<16x16xf32>
    %c2_88 = arith.constant 2 : index
    %c0_89 = arith.constant 0 : index
    %94 = memref.load %arg3[%c2_88, %c0_89] : memref<4x8xf32, #tpu.memory_space<smem>>
    %c0_90 = arith.constant 0 : index
    %c0_91 = arith.constant 0 : index
    %c0_92 = arith.constant 0 : index
    %c0_93 = arith.constant 0 : index
    %95 = vector.load %arg2[%c0_90, %c0_91, %c0_92, %c0_93] : memref<1x8x16x16xf32, #tpu.memory_space<vmem>>, vector<1x1x16x16xf32>
    %96 = vector.shape_cast %95 : vector<1x1x16x16xf32> to vector<16x16xf32>
    %97 = vector.broadcast %94 : f32 to vector<16x16xf32>
    %98 = arith.mulf %97, %96 : vector<16x16xf32>
    %c2_94 = arith.constant 2 : index
    %c1_95 = arith.constant 1 : index
    %99 = memref.load %arg3[%c2_94, %c1_95] : memref<4x8xf32, #tpu.memory_space<smem>>
    %c0_96 = arith.constant 0 : index
    %c1_97 = arith.constant 1 : index
    %c0_98 = arith.constant 0 : index
    %c0_99 = arith.constant 0 : index
    %100 = vector.load %arg2[%c0_96, %c1_97, %c0_98, %c0_99] : memref<1x8x16x16xf32, #tpu.memory_space<vmem>>, vector<1x1x16x16xf32>
    %101 = vector.shape_cast %100 : vector<1x1x16x16xf32> to vector<16x16xf32>
    %102 = vector.broadcast %99 : f32 to vector<16x16xf32>
    %103 = arith.mulf %102, %101 : vector<16x16xf32>
    %104 = arith.addf %98, %103 : vector<16x16xf32>
    %c2_100 = arith.constant 2 : index
    %c2_101 = arith.constant 2 : index
    %105 = memref.load %arg3[%c2_100, %c2_101] : memref<4x8xf32, #tpu.memory_space<smem>>
    %c0_102 = arith.constant 0 : index
    %c2_103 = arith.constant 2 : index
    %c0_104 = arith.constant 0 : index
    %c0_105 = arith.constant 0 : index
    %106 = vector.load %arg2[%c0_102, %c2_103, %c0_104, %c0_105] : memref<1x8x16x16xf32, #tpu.memory_space<vmem>>, vector<1x1x16x16xf32>
    %107 = vector.shape_cast %106 : vector<1x1x16x16xf32> to vector<16x16xf32>
    %108 = vector.broadcast %105 : f32 to vector<16x16xf32>
    %109 = arith.mulf %108, %107 : vector<16x16xf32>
    %110 = arith.addf %104, %109 : vector<16x16xf32>
    %c2_106 = arith.constant 2 : index
    %c3_107 = arith.constant 3 : index
    %111 = memref.load %arg3[%c2_106, %c3_107] : memref<4x8xf32, #tpu.memory_space<smem>>
    %c0_108 = arith.constant 0 : index
    %c3_109 = arith.constant 3 : index
    %c0_110 = arith.constant 0 : index
    %c0_111 = arith.constant 0 : index
    %112 = vector.load %arg2[%c0_108, %c3_109, %c0_110, %c0_111] : memref<1x8x16x16xf32, #tpu.memory_space<vmem>>, vector<1x1x16x16xf32>
    %113 = vector.shape_cast %112 : vector<1x1x16x16xf32> to vector<16x16xf32>
    %114 = vector.broadcast %111 : f32 to vector<16x16xf32>
    %115 = arith.mulf %114, %113 : vector<16x16xf32>
    %116 = arith.addf %110, %115 : vector<16x16xf32>
    %c2_112 = arith.constant 2 : index
    %c4_113 = arith.constant 4 : index
    %117 = memref.load %arg3[%c2_112, %c4_113] : memref<4x8xf32, #tpu.memory_space<smem>>
    %c0_114 = arith.constant 0 : index
    %c4_115 = arith.constant 4 : index
    %c0_116 = arith.constant 0 : index
    %c0_117 = arith.constant 0 : index
    %118 = vector.load %arg2[%c0_114, %c4_115, %c0_116, %c0_117] : memref<1x8x16x16xf32, #tpu.memory_space<vmem>>, vector<1x1x16x16xf32>
    %119 = vector.shape_cast %118 : vector<1x1x16x16xf32> to vector<16x16xf32>
    %120 = vector.broadcast %117 : f32 to vector<16x16xf32>
    %121 = arith.mulf %120, %119 : vector<16x16xf32>
    %122 = arith.addf %116, %121 : vector<16x16xf32>
    %c2_118 = arith.constant 2 : index
    %c5_119 = arith.constant 5 : index
    %123 = memref.load %arg3[%c2_118, %c5_119] : memref<4x8xf32, #tpu.memory_space<smem>>
    %c0_120 = arith.constant 0 : index
    %c5_121 = arith.constant 5 : index
    %c0_122 = arith.constant 0 : index
    %c0_123 = arith.constant 0 : index
    %124 = vector.load %arg2[%c0_120, %c5_121, %c0_122, %c0_123] : memref<1x8x16x16xf32, #tpu.memory_space<vmem>>, vector<1x1x16x16xf32>
    %125 = vector.shape_cast %124 : vector<1x1x16x16xf32> to vector<16x16xf32>
    %126 = vector.broadcast %123 : f32 to vector<16x16xf32>
    %127 = arith.mulf %126, %125 : vector<16x16xf32>
    %128 = arith.addf %122, %127 : vector<16x16xf32>
    %c2_124 = arith.constant 2 : index
    %c6_125 = arith.constant 6 : index
    %129 = memref.load %arg3[%c2_124, %c6_125] : memref<4x8xf32, #tpu.memory_space<smem>>
    %c0_126 = arith.constant 0 : index
    %c6_127 = arith.constant 6 : index
    %c0_128 = arith.constant 0 : index
    %c0_129 = arith.constant 0 : index
    %130 = vector.load %arg2[%c0_126, %c6_127, %c0_128, %c0_129] : memref<1x8x16x16xf32, #tpu.memory_space<vmem>>, vector<1x1x16x16xf32>
    %131 = vector.shape_cast %130 : vector<1x1x16x16xf32> to vector<16x16xf32>
    %132 = vector.broadcast %129 : f32 to vector<16x16xf32>
    %133 = arith.mulf %132, %131 : vector<16x16xf32>
    %134 = arith.addf %128, %133 : vector<16x16xf32>
    %c2_130 = arith.constant 2 : index
    %c7_131 = arith.constant 7 : index
    %135 = memref.load %arg3[%c2_130, %c7_131] : memref<4x8xf32, #tpu.memory_space<smem>>
    %c0_132 = arith.constant 0 : index
    %c7_133 = arith.constant 7 : index
    %c0_134 = arith.constant 0 : index
    %c0_135 = arith.constant 0 : index
    %136 = vector.load %arg2[%c0_132, %c7_133, %c0_134, %c0_135] : memref<1x8x16x16xf32, #tpu.memory_space<vmem>>, vector<1x1x16x16xf32>
    %137 = vector.shape_cast %136 : vector<1x1x16x16xf32> to vector<16x16xf32>
    %138 = vector.broadcast %135 : f32 to vector<16x16xf32>
    %139 = arith.mulf %138, %137 : vector<16x16xf32>
    %140 = arith.addf %134, %139 : vector<16x16xf32>
    %c3_136 = arith.constant 3 : index
    %c0_137 = arith.constant 0 : index
    %141 = memref.load %arg3[%c3_136, %c0_137] : memref<4x8xf32, #tpu.memory_space<smem>>
    %c0_138 = arith.constant 0 : index
    %c0_139 = arith.constant 0 : index
    %c0_140 = arith.constant 0 : index
    %c0_141 = arith.constant 0 : index
    %142 = vector.load %arg2[%c0_138, %c0_139, %c0_140, %c0_141] : memref<1x8x16x16xf32, #tpu.memory_space<vmem>>, vector<1x1x16x16xf32>
    %143 = vector.shape_cast %142 : vector<1x1x16x16xf32> to vector<16x16xf32>
    %144 = vector.broadcast %141 : f32 to vector<16x16xf32>
    %145 = arith.mulf %144, %143 : vector<16x16xf32>
    %c3_142 = arith.constant 3 : index
    %c1_143 = arith.constant 1 : index
    %146 = memref.load %arg3[%c3_142, %c1_143] : memref<4x8xf32, #tpu.memory_space<smem>>
    %c0_144 = arith.constant 0 : index
    %c1_145 = arith.constant 1 : index
    %c0_146 = arith.constant 0 : index
    %c0_147 = arith.constant 0 : index
    %147 = vector.load %arg2[%c0_144, %c1_145, %c0_146, %c0_147] : memref<1x8x16x16xf32, #tpu.memory_space<vmem>>, vector<1x1x16x16xf32>
    %148 = vector.shape_cast %147 : vector<1x1x16x16xf32> to vector<16x16xf32>
    %149 = vector.broadcast %146 : f32 to vector<16x16xf32>
    %150 = arith.mulf %149, %148 : vector<16x16xf32>
    %151 = arith.addf %145, %150 : vector<16x16xf32>
    %c3_148 = arith.constant 3 : index
    %c2_149 = arith.constant 2 : index
    %152 = memref.load %arg3[%c3_148, %c2_149] : memref<4x8xf32, #tpu.memory_space<smem>>
    %c0_150 = arith.constant 0 : index
    %c2_151 = arith.constant 2 : index
    %c0_152 = arith.constant 0 : index
    %c0_153 = arith.constant 0 : index
    %153 = vector.load %arg2[%c0_150, %c2_151, %c0_152, %c0_153] : memref<1x8x16x16xf32, #tpu.memory_space<vmem>>, vector<1x1x16x16xf32>
    %154 = vector.shape_cast %153 : vector<1x1x16x16xf32> to vector<16x16xf32>
    %155 = vector.broadcast %152 : f32 to vector<16x16xf32>
    %156 = arith.mulf %155, %154 : vector<16x16xf32>
    %157 = arith.addf %151, %156 : vector<16x16xf32>
    %c3_154 = arith.constant 3 : index
    %c3_155 = arith.constant 3 : index
    %158 = memref.load %arg3[%c3_154, %c3_155] : memref<4x8xf32, #tpu.memory_space<smem>>
    %c0_156 = arith.constant 0 : index
    %c3_157 = arith.constant 3 : index
    %c0_158 = arith.constant 0 : index
    %c0_159 = arith.constant 0 : index
    %159 = vector.load %arg2[%c0_156, %c3_157, %c0_158, %c0_159] : memref<1x8x16x16xf32, #tpu.memory_space<vmem>>, vector<1x1x16x16xf32>
    %160 = vector.shape_cast %159 : vector<1x1x16x16xf32> to vector<16x16xf32>
    %161 = vector.broadcast %158 : f32 to vector<16x16xf32>
    %162 = arith.mulf %161, %160 : vector<16x16xf32>
    %163 = arith.addf %157, %162 : vector<16x16xf32>
    %c3_160 = arith.constant 3 : index
    %c4_161 = arith.constant 4 : index
    %164 = memref.load %arg3[%c3_160, %c4_161] : memref<4x8xf32, #tpu.memory_space<smem>>
    %c0_162 = arith.constant 0 : index
    %c4_163 = arith.constant 4 : index
    %c0_164 = arith.constant 0 : index
    %c0_165 = arith.constant 0 : index
    %165 = vector.load %arg2[%c0_162, %c4_163, %c0_164, %c0_165] : memref<1x8x16x16xf32, #tpu.memory_space<vmem>>, vector<1x1x16x16xf32>
    %166 = vector.shape_cast %165 : vector<1x1x16x16xf32> to vector<16x16xf32>
    %167 = vector.broadcast %164 : f32 to vector<16x16xf32>
    %168 = arith.mulf %167, %166 : vector<16x16xf32>
    %169 = arith.addf %163, %168 : vector<16x16xf32>
    %c3_166 = arith.constant 3 : index
    %c5_167 = arith.constant 5 : index
    %170 = memref.load %arg3[%c3_166, %c5_167] : memref<4x8xf32, #tpu.memory_space<smem>>
    %c0_168 = arith.constant 0 : index
    %c5_169 = arith.constant 5 : index
    %c0_170 = arith.constant 0 : index
    %c0_171 = arith.constant 0 : index
    %171 = vector.load %arg2[%c0_168, %c5_169, %c0_170, %c0_171] : memref<1x8x16x16xf32, #tpu.memory_space<vmem>>, vector<1x1x16x16xf32>
    %172 = vector.shape_cast %171 : vector<1x1x16x16xf32> to vector<16x16xf32>
    %173 = vector.broadcast %170 : f32 to vector<16x16xf32>
    %174 = arith.mulf %173, %172 : vector<16x16xf32>
    %175 = arith.addf %169, %174 : vector<16x16xf32>
    %c3_172 = arith.constant 3 : index
    %c6_173 = arith.constant 6 : index
    %176 = memref.load %arg3[%c3_172, %c6_173] : memref<4x8xf32, #tpu.memory_space<smem>>
    %c0_174 = arith.constant 0 : index
    %c6_175 = arith.constant 6 : index
    %c0_176 = arith.constant 0 : index
    %c0_177 = arith.constant 0 : index
    %177 = vector.load %arg2[%c0_174, %c6_175, %c0_176, %c0_177] : memref<1x8x16x16xf32, #tpu.memory_space<vmem>>, vector<1x1x16x16xf32>
    %178 = vector.shape_cast %177 : vector<1x1x16x16xf32> to vector<16x16xf32>
    %179 = vector.broadcast %176 : f32 to vector<16x16xf32>
    %180 = arith.mulf %179, %178 : vector<16x16xf32>
    %181 = arith.addf %175, %180 : vector<16x16xf32>
    %c3_178 = arith.constant 3 : index
    %c7_179 = arith.constant 7 : index
    %182 = memref.load %arg3[%c3_178, %c7_179] : memref<4x8xf32, #tpu.memory_space<smem>>
    %c0_180 = arith.constant 0 : index
    %c7_181 = arith.constant 7 : index
    %c0_182 = arith.constant 0 : index
    %c0_183 = arith.constant 0 : index
    %183 = vector.load %arg2[%c0_180, %c7_181, %c0_182, %c0_183] : memref<1x8x16x16xf32, #tpu.memory_space<vmem>>, vector<1x1x16x16xf32>
    %184 = vector.shape_cast %183 : vector<1x1x16x16xf32> to vector<16x16xf32>
    %185 = vector.broadcast %182 : f32 to vector<16x16xf32>
    %186 = arith.mulf %185, %184 : vector<16x16xf32>
    %187 = arith.addf %181, %186 : vector<16x16xf32>
    %188 = arith.maximumf %46, %93 : vector<16x16xf32>
    %189 = arith.maximumf %188, %140 : vector<16x16xf32>
    %190 = arith.maximumf %189, %187 : vector<16x16xf32>
    %191 = arith.subf %46, %190 : vector<16x16xf32>
    %192 = math.exp %191 : vector<16x16xf32>
    %193 = arith.subf %93, %190 : vector<16x16xf32>
    %194 = math.exp %193 : vector<16x16xf32>
    %195 = arith.subf %140, %190 : vector<16x16xf32>
    %196 = math.exp %195 : vector<16x16xf32>
    %197 = arith.subf %187, %190 : vector<16x16xf32>
    %198 = math.exp %197 : vector<16x16xf32>
    %199 = arith.addf %192, %194 : vector<16x16xf32>
    %200 = arith.addf %199, %196 : vector<16x16xf32>
    %201 = arith.addf %200, %198 : vector<16x16xf32>
    %cst = arith.constant 1.000000e+00 : f32
    %202 = vector.broadcast %cst : f32 to vector<16x16xf32>
    %203 = arith.divf %202, %201 : vector<16x16xf32>
    %204 = arith.mulf %192, %203 : vector<16x16xf32>
    %c0_184 = arith.constant 0 : index
    %c0_185 = arith.constant 0 : index
    %c0_186 = arith.constant 0 : index
    %205 = vector.load %arg8[%c0_184, %c0_185, %c0_186] : memref<4x16x16xf32, #tpu.memory_space<vmem>>, vector<1x16x16xf32>
    %206 = vector.shape_cast %205 : vector<1x16x16xf32> to vector<16x16xf32>
    %207 = vector.shape_cast %204 : vector<16x16xf32> to vector<1x16x16xf32>
    tpu.vector_store %arg8[%c0_184, %c0_185, %c0_186], %207 {strides = array<i32>} : memref<4x16x16xf32, #tpu.memory_space<vmem>>, vector<1x16x16xf32>,
    %208 = arith.mulf %194, %203 : vector<16x16xf32>
    %c1_187 = arith.constant 1 : index
    %c0_188 = arith.constant 0 : index
    %c0_189 = arith.constant 0 : index
    %209 = vector.load %arg8[%c1_187, %c0_188, %c0_189] : memref<4x16x16xf32, #tpu.memory_space<vmem>>, vector<1x16x16xf32>
    %210 = vector.shape_cast %209 : vector<1x16x16xf32> to vector<16x16xf32>
    %211 = vector.shape_cast %208 : vector<16x16xf32> to vector<1x16x16xf32>
    tpu.vector_store %arg8[%c1_187, %c0_188, %c0_189], %211 {strides = array<i32>} : memref<4x16x16xf32, #tpu.memory_space<vmem>>, vector<1x16x16xf32>,
    %212 = arith.mulf %196, %203 : vector<16x16xf32>
    %c2_190 = arith.constant 2 : index
    %c0_191 = arith.constant 0 : index
    %c0_192 = arith.constant 0 : index
    %213 = vector.load %arg8[%c2_190, %c0_191, %c0_192] : memref<4x16x16xf32, #tpu.memory_space<vmem>>, vector<1x16x16xf32>
    %214 = vector.shape_cast %213 : vector<1x16x16xf32> to vector<16x16xf32>
    %215 = vector.shape_cast %212 : vector<16x16xf32> to vector<1x16x16xf32>
    tpu.vector_store %arg8[%c2_190, %c0_191, %c0_192], %215 {strides = array<i32>} : memref<4x16x16xf32, #tpu.memory_space<vmem>>, vector<1x16x16xf32>,
    %216 = arith.mulf %198, %203 : vector<16x16xf32>
    %c3_193 = arith.constant 3 : index
    %c0_194 = arith.constant 0 : index
    %c0_195 = arith.constant 0 : index
    %217 = vector.load %arg8[%c3_193, %c0_194, %c0_195] : memref<4x16x16xf32, #tpu.memory_space<vmem>>, vector<1x16x16xf32>
    %218 = vector.shape_cast %217 : vector<1x16x16xf32> to vector<16x16xf32>
    %219 = vector.shape_cast %216 : vector<16x16xf32> to vector<1x16x16xf32>
    tpu.vector_store %arg8[%c3_193, %c0_194, %c0_195], %219 {strides = array<i32>} : memref<4x16x16xf32, #tpu.memory_space<vmem>>, vector<1x16x16xf32>,
    %c0_196 = arith.constant 0 : index
    %c0_197 = arith.constant 0 : index
    %220 = vector.load %arg4[%c0_196, %c0_197] : memref<200x16xf32, #tpu.memory_space<vmem>>, vector<200x16xf32>
    %c2_i32 = arith.constant 2 : i32
    %221 = arith.muli %arg1, %c2_i32 : i32
    %c0_i32 = arith.constant 0 : i32
    %222 = arith.addi %221, %c0_i32 : i32
    %223 = arith.index_cast %222 : i32 to index
    %c0_198 = arith.constant 0 : index
    %c0_199 = arith.constant 0 : index
    %224 = vector.load %arg8[%223, %c0_198, %c0_199] : memref<4x16x16xf32, #tpu.memory_space<vmem>>, vector<1x16x16xf32>
    %225 = vector.shape_cast %224 : vector<1x16x16xf32> to vector<16x16xf32>
    %cst_200 = arith.constant dense<0.000000e+00> : vector<200x16xf32>
    %226 = tpu.matmul %220, %225, %cst_200 {dimension_numbers = #tpu.dot_dimension_numbers<[1], [0], [0], [1], [0, 0, 1, 1], [], []>} : vector<200x16xf32>, vector<16x16xf32>, vector<200x16xf32> -> vector<200x16xf32>
    %c0_201 = arith.constant 0 : index
    %c0_202 = arith.constant 0 : index
    %227 = vector.load %arg9[%c0_201, %c0_202] : memref<400x16xf32, #tpu.memory_space<vmem>>, vector<200x16xf32>
    tpu.vector_store %arg9[%c0_201, %c0_202], %226 {strides = array<i32>} : memref<400x16xf32, #tpu.memory_space<vmem>>, vector<200x16xf32>,
    %c2_i32_203 = arith.constant 2 : i32
    %228 = arith.muli %arg1, %c2_i32_203 : i32
    %c1_i32 = arith.constant 1 : i32
    %229 = arith.addi %228, %c1_i32 : i32
    %230 = arith.index_cast %229 : i32 to index
    %c0_204 = arith.constant 0 : index
    %c0_205 = arith.constant 0 : index
    %231 = vector.load %arg8[%230, %c0_204, %c0_205] : memref<4x16x16xf32, #tpu.memory_space<vmem>>, vector<1x16x16xf32>
    %232 = vector.shape_cast %231 : vector<1x16x16xf32> to vector<16x16xf32>
    %cst_206 = arith.constant dense<0.000000e+00> : vector<200x16xf32>
    %233 = tpu.matmul %220, %232, %cst_206 {dimension_numbers = #tpu.dot_dimension_numbers<[1], [0], [0], [1], [0, 0, 1, 1], [], []>} : vector<200x16xf32>, vector<16x16xf32>, vector<200x16xf32> -> vector<200x16xf32>
    %c200 = arith.constant 200 : index
    %c0_207 = arith.constant 0 : index
    %234 = vector.load %arg9[%c200, %c0_207] : memref<400x16xf32, #tpu.memory_space<vmem>>, vector<200x16xf32>
    tpu.vector_store %arg9[%c200, %c0_207], %233 {strides = array<i32>} : memref<400x16xf32, #tpu.memory_space<vmem>>, vector<200x16xf32>,
    %c0_208 = arith.constant 0 : index
    %c0_209 = arith.constant 0 : index
    %235 = vector.load %arg9[%c0_208, %c0_209] : memref<400x16xf32, #tpu.memory_space<vmem>>, vector<400x16xf32>
    %c0_210 = arith.constant 0 : index
    %c0_211 = arith.constant 0 : index
    %236 = vector.load %arg5[%c0_210, %c0_211] : memref<16x200xf32, #tpu.memory_space<vmem>>, vector<16x200xf32>
    %cst_212 = arith.constant dense<0.000000e+00> : vector<400x200xf32>
    %237 = tpu.matmul %235, %236, %cst_212 {dimension_numbers = #tpu.dot_dimension_numbers<[1], [0], [0], [1], [0, 0, 1, 1], [], []>} : vector<400x16xf32>, vector<16x200xf32>, vector<400x200xf32> -> vector<400x200xf32>
    %238 = vector.shape_cast %237 : vector<400x200xf32> to vector<2x200x200xf32>
    %c0_213 = arith.constant 0 : index
    %c0_214 = arith.constant 0 : index
    %239 = vector.load %arg6[%c0_213, %c0_214] : memref<200x200xf32, #tpu.memory_space<vmem>>, vector<200x200xf32>
    %240 = vector.shape_cast %239 : vector<200x200xf32> to vector<1x200x200xf32>
    %241 = vector.broadcast %240 : vector<1x200x200xf32> to vector<2x200x200xf32>
    %242 = arith.addf %238, %241 : vector<2x200x200xf32>
    %243 = vector.shape_cast %242 : vector<2x200x200xf32> to vector<400x200xf32>
    %c0_215 = arith.constant 0 : index
    %c0_216 = arith.constant 0 : index
    %c0_217 = arith.constant 0 : index
    %244 = vector.load %arg7[%c0_215, %c0_216, %c0_217] : memref<1x400x200xf32, #tpu.memory_space<vmem>>, vector<1x400x200xf32>
    %245 = vector.shape_cast %244 : vector<1x400x200xf32> to vector<400x200xf32>
    %246 = vector.shape_cast %243 : vector<400x200xf32> to vector<1x400x200xf32>
    tpu.vector_store %arg7[%c0_215, %c0_216, %c0_217], %246 {strides = array<i32>} : memref<1x400x200xf32, #tpu.memory_space<vmem>>, vector<1x400x200xf32>,
    return
  }
  func.func @transform_0(%arg0: i32, %arg1: i32) -> (i32, i32, i32, i32) {
    %c0_i32 = arith.constant 0 : i32
    %c0_i32_0 = arith.constant 0 : i32
    %c0_i32_1 = arith.constant 0 : i32
    %c0_i32_2 = arith.constant 0 : i32
    return %arg0, %c0_i32, %c0_i32_0, %c0_i32_1 : i32, i32, i32, i32
  }
  func.func @transform_1(%arg0: i32, %arg1: i32) -> (i32, i32) {
    %c0_i32 = arith.constant 0 : i32
    %c0_i32_0 = arith.constant 0 : i32
    %c0_i32_1 = arith.constant 0 : i32
    return %c0_i32, %c0_i32_0 : i32, i32
  }
  func.func @transform_2(%arg0: i32, %arg1: i32) -> (i32, i32) {
    %c0_i32 = arith.constant 0 : i32
    %c0_i32_0 = arith.constant 0 : i32
    %c0_i32_1 = arith.constant 0 : i32
    return %c0_i32, %c0_i32_0 : i32, i32
  }
  func.func @transform_3(%arg0: i32, %arg1: i32) -> (i32, i32) {
    %c0_i32 = arith.constant 0 : i32
    %c0_i32_0 = arith.constant 0 : i32
    %c0_i32_1 = arith.constant 0 : i32
    return %c0_i32, %c0_i32_0 : i32, i32
  }
  func.func @transform_4(%arg0: i32, %arg1: i32) -> (i32, i32) {
    %c0_i32 = arith.constant 0 : i32
    %c0_i32_0 = arith.constant 0 : i32
    %c0_i32_1 = arith.constant 0 : i32
    return %c0_i32, %c0_i32_0 : i32, i32
  }
  func.func @transform_5(%arg0: i32, %arg1: i32) -> (i32, i32, i32) {
    %c0_i32 = arith.constant 0 : i32
    %c0_i32_0 = arith.constant 0 : i32
    return %arg0, %arg1, %c0_i32 : i32, i32, i32
  }
}

</mosaic_0001>

<llo_original>
// kernel: tpu_custom_call.1
$region0: #{tpu_custom_call.1}
  #allocation0 [shape = 'u32[]', space=smem, size = 0x4, offset = 0x4, fixed_abs, tag = 'smem constant byte address 0x4 - core index']
  #allocation1 [shape = 'u32[144,128]{1,0:T(1,128)}', space=vmem, size = 0x12000, scoped, tag = 'internal scratch']
  #allocation2 [shape = 'f32[4,16,16]{2,1,0:T(8,128)}', space=vmem, size = 0x8000, scoped, tag = 'scratch operand']
  #allocation3 [shape = 'f32[400,16]{1,0:T(8,128)}', space=vmem, size = 0x32000, scoped, tag = 'scratch operand']
  %s0 = inlined_call_operand.hbm [shape: f32[2,8,16,16], index: 0, kind: input, shape index: {}]
  %s1 = inlined_call_operand.hbm [shape: f32[4,8], index: 1, kind: input, shape index: {}]
  %s2 = inlined_call_operand.vmem [shape: f32[200,16], index: 2, kind: input, shape index: {}]
  %s3 = inlined_call_operand.hbm [shape: f32[16,200], index: 3, kind: input, shape index: {}]
  %s4 = inlined_call_operand.hbm [shape: f32[200,200], index: 4, kind: input, shape index: {}]
  %s5 = inlined_call_operand.vmem [shape: f32[2,800,200], index: 5, kind: output, shape index: {}]
  %s6 = sld [smem:[#allocation0]]
  $region69: #{tpu_custom_call.1} parent=0
    _
  %s8 = ssub.s32 1, %s6
  %s9 = scalar_select 0, %s8, %s6
  $region1: #{tpu_custom_call.1} parent=0
    #allocation4 [shape = 'u8[131072]{0}', space=vmem, size = 0x20000, scoped, tag = 'input window, operand 0']
    #allocation5 [shape = 's32[2]{0}', space=sflag, size = 0x8, scoped, tag = 'scoped memory for tpu_custom_call.1']
    #allocation6 [shape = 's32[2]{0}', space=sflag, size = 0x8, scoped, tag = 'scoped memory for tpu_custom_call.1']
    #allocation7 [shape = 'u8[2048]{0}', space=smem, size = 0x800, scoped, tag = 'input window, operand 1, single buffered']
    #allocation8 [shape = 'u8[16384]{0}', space=vmem, size = 0x4000, scoped, tag = 'input window, operand 3, single buffered']
    #allocation9 [shape = 's32[1]{0}', space=sflag, size = 0x4, scoped, tag = 'scoped memory for tpu_custom_call.1']
    #allocation10 [shape = 'u8[204800]{0}', space=vmem, size = 0x32000, scoped, tag = 'input window, operand 4, single buffered']
    %10 = vsyncpa [#allocation5], 0
    %s11 = scalar_lea.sflag [#allocation5], 1
    %12 = vsyncpa %s11, 0
    %13 = vsyncpa [#allocation6], 0
    %14 = vsyncpa [#allocation9], 0
    loop: start=0, step=1, limit=6
    $region2: #{tpu_custom_call.1} parent=1 // loop_pre_header
      _
    $region3: #{tpu_custom_call.1} parent=1 // loop_header
      %s16 = sphi 0, %s20
      %p17 = scmp.ge.s32.totalorder %s16, 6
      %s23 = sphi 0, %s35
      %s24 = sphi 0, %s31
      %s25 = sphi 0, %s23
      %s26 = sphi 0, %s24
      %s27 = sphi 0, %s25
      %s28 = sphi 0, %s26
      %s38 = sphi 0, %s40
      %s41 = sphi 0, %s38
      %s42 = sphi 0, %s41
      %s58 = sphi 0, %s42
      %s62 = sphi 0, %s62
      %s64 = sphi 0, %s62
      %s65 = sphi 0, %s64
      %s79 = sphi 0, %s65
      %s83 = sphi 0, %s83
      %s85 = sphi 0, %s83
      %s86 = sphi 0, %s85
      %s100 = sphi 0, %s86
      %s104 = sphi 0, %s104
      %s106 = sphi 0, %s104
      %s107 = sphi 0, %s106
      %s121 = sphi 0, %s107
      %s125 = sphi 0, %s125
      %s127 = sphi 0, %s125
      %s128 = sphi 0, %s127
      %s142 = sphi 0, %s128
      %s150 = sphi 0, %s152
      %s153 = sphi 0, %s150
      %s154 = sphi 0, %s153
      %s170 = sphi 0, %s154
    $region4: #{tpu_custom_call.1} parent=1 // loop_header_branch
      %19 = sbr.rel (%p17) target = $region8
    $region5: #{tpu_custom_call.1} parent=1 // loop_body
      %s21 = ssub.s32 %s16, 1
      %s22 = ssub.s32 %s16, 2
      %s29 = sadd.s32 1, %s24
      %p30 = scmp.ge.s32.totalorder %s29, 2
      %s31 = scalar_select %p30, 0, %s29
      %s32 = sadd.s32 1, %s23
      %s33 = scalar_select %p30, %s32, %s23
      %p34 = scmp.ge.s32.totalorder %s33, 2
      %s35 = scalar_select %p34, 0, %s33
      %s36 = ssub.s32 %s23, %s35
      %p37 = scmp.eq.s32.totalorder %s36, 0
      %s39 = sadd.s32 %s38, 1
      %s40 = scalar_select %p37, %s38, %s39
      %p43 = pneg %p37
      %p44 = scmp.eq.s32.totalorder %s16, 3
      %p45 = por %p43, %p44
      %p46 = scmp.ne.s32.totalorder %s38, %s41
      %p47 = scmp.eq.s32.totalorder %s16, 0
      %p48 = por %p46, %p47
      %p49 = scmp.ne.s32.totalorder %s38, %s41
      %p50 = scmp.eq.s32.totalorder %s21, 3
      %p51 = por %p49, %p50
      %p52 = scmp.ne.s32.totalorder %s41, %s42
      %p53 = scmp.eq.s32.totalorder %s21, 0
      %p54 = por %p52, %p53
      %p55 = scmp.ne.s32.totalorder %s41, %s42
      %p56 = scmp.eq.s32.totalorder %s22, 3
      %p57 = por %p55, %p56
      %p59 = scmp.ne.s32.totalorder %s42, %s58
      %p60 = scmp.eq.s32.totalorder %s22, 0
      %p61 = por %p59, %p60
      %s63 = sadd.s32 %s62, 1
      %p66 = scmp.eq.s32.totalorder %s16, 3
      %p67 = scmp.ne.s32.totalorder %s62, %s64
      %p68 = scmp.eq.s32.totalorder %s16, 0
      %p69 = por %p67, %p68
      %p70 = scmp.ne.s32.totalorder %s62, %s64
      %p71 = scmp.eq.s32.totalorder %s21, 3
      %p72 = por %p70, %p71
      %p73 = scmp.ne.s32.totalorder %s64, %s65
      %p74 = scmp.eq.s32.totalorder %s21, 0
      %p75 = por %p73, %p74
      %p76 = scmp.ne.s32.totalorder %s64, %s65
      %p77 = scmp.eq.s32.totalorder %s22, 3
      %p78 = por %p76, %p77
      %p80 = scmp.ne.s32.totalorder %s65, %s79
      %p81 = scmp.eq.s32.totalorder %s22, 0
      %p82 = por %p80, %p81
      %s84 = sadd.s32 %s83, 1
      %p87 = scmp.eq.s32.totalorder %s16, 3
      %p88 = scmp.ne.s32.totalorder %s83, %s85
      %p89 = scmp.eq.s32.totalorder %s16, 0
      %p90 = por %p88, %p89
      %p91 = scmp.ne.s32.totalorder %s83, %s85
      %p92 = scmp.eq.s32.totalorder %s21, 3
      %p93 = por %p91, %p92
      %p94 = scmp.ne.s32.totalorder %s85, %s86
      %p95 = scmp.eq.s32.totalorder %s21, 0
      %p96 = por %p94, %p95
      %p97 = scmp.ne.s32.totalorder %s85, %s86
      %p98 = scmp.eq.s32.totalorder %s22, 3
      %p99 = por %p97, %p98
      %p101 = scmp.ne.s32.totalorder %s86, %s100
      %p102 = scmp.eq.s32.totalorder %s22, 0
      %p103 = por %p101, %p102
      %s105 = sadd.s32 %s104, 1
      %p108 = scmp.eq.s32.totalorder %s16, 3
      %p109 = scmp.ne.s32.totalorder %s104, %s106
      %p110 = scmp.eq.s32.totalorder %s16, 0
      %p111 = por %p109, %p110
      %p112 = scmp.ne.s32.totalorder %s104, %s106
      %p113 = scmp.eq.s32.totalorder %s21, 3
      %p114 = por %p112, %p113
      %p115 = scmp.ne.s32.totalorder %s106, %s107
      %p116 = scmp.eq.s32.totalorder %s21, 0
      %p117 = por %p115, %p116
      %p118 = scmp.ne.s32.totalorder %s106, %s107
      %p119 = scmp.eq.s32.totalorder %s22, 3
      %p120 = por %p118, %p119
      %p122 = scmp.ne.s32.totalorder %s107, %s121
      %p123 = scmp.eq.s32.totalorder %s22, 0
      %p124 = por %p122, %p123
      %s126 = sadd.s32 %s125, 1
      %p129 = scmp.eq.s32.totalorder %s16, 3
      %p130 = scmp.ne.s32.totalorder %s125, %s127
      %p131 = scmp.eq.s32.totalorder %s16, 0
      %p132 = por %p130, %p131
      %p133 = scmp.ne.s32.totalorder %s125, %s127
      %p134 = scmp.eq.s32.totalorder %s21, 3
      %p135 = por %p133, %p134
      %p136 = scmp.ne.s32.totalorder %s127, %s128
      %p137 = scmp.eq.s32.totalorder %s21, 0
      %p138 = por %p136, %p137
      %p139 = scmp.ne.s32.totalorder %s127, %s128
      %p140 = scmp.eq.s32.totalorder %s22, 3
      %p141 = por %p139, %p140
      %p143 = scmp.ne.s32.totalorder %s128, %s142
      %p144 = scmp.eq.s32.totalorder %s22, 0
      %p145 = por %p143, %p144
      %s146 = ssub.s32 %s23, %s35
      %s147 = ssub.s32 %s24, %s31
      %s148 = sor.u32 %s146, %s147
      %p149 = scmp.eq.s32.totalorder %s148, 0
      %s151 = sadd.s32 %s150, 1
      %s152 = scalar_select %p149, %s150, %s151
      %p155 = pneg %p149
      %p156 = scmp.eq.s32.totalorder %s16, 3
      %p157 = por %p155, %p156
      %p158 = scmp.ne.s32.totalorder %s150, %s153
      %p159 = scmp.eq.s32.totalorder %s16, 0
      %p160 = por %p158, %p159
      %p161 = scmp.ne.s32.totalorder %s150, %s153
      %p162 = scmp.eq.s32.totalorder %s21, 3
      %p163 = por %p161, %p162
      %p164 = scmp.ne.s32.totalorder %s153, %s154
      %p165 = scmp.eq.s32.totalorder %s21, 0
      %p166 = por %p164, %p165
      %p167 = scmp.ne.s32.totalorder %s153, %s154
      %p168 = scmp.eq.s32.totalorder %s22, 3
      %p169 = por %p167, %p168
      %p171 = scmp.ne.s32.totalorder %s154, %s170
      %p172 = scmp.eq.s32.totalorder %s22, 0
      %p173 = por %p171, %p172
      %p174 = scmp.le.s32.totalorder 1, %s16
      %p175 = scmp.lt.s32.totalorder %s16, 5
      %p176 = pnand %p174, %p175
      %p177 = pneg %p176
      // Predicated region
      $region9: #{tpu_custom_call.1} parent=5 // pred_check
        _
      $region10: #{tpu_custom_call.1} parent=5 // pred_check_branch
        %179 = sbr.rel (%p176) target = $region12
      $region11: #{tpu_custom_call.1} parent=5 // pred_region
        %s180 = ssub.s32 %s16, 1
        // Predicated region
        $region13: #{tpu_custom_call.1} parent=11 // pred_check
          %p181 = pneg %p75
        $region14: #{tpu_custom_call.1} parent=11 // pred_check_branch
          %183 = sbr.rel (%p181) target = $region16
        $region15: #{tpu_custom_call.1} parent=11 // pred_region
          %s185 = ssub.s32 64, 64
          %186 = vsyncadd [#allocation6], %s185
          %189 = dma.hbm_to_smem %s1, 64, [#allocation7], [#allocation6]
        $region16: #{tpu_custom_call.1} parent=11 // pred_fallthru
          _
        // Predicated region
        $region17: #{tpu_custom_call.1} parent=11 // pred_check
          %p190 = pneg %p96
        $region18: #{tpu_custom_call.1} parent=11 // pred_check_branch
          %192 = sbr.rel (%p190) target = $region20
        $region19: #{tpu_custom_call.1} parent=11 // pred_region
          _
        $region20: #{tpu_custom_call.1} parent=11 // pred_fallthru
          _
        // Predicated region
        $region21: #{tpu_custom_call.1} parent=11 // pred_check
          %p193 = pneg %p117
        $region22: #{tpu_custom_call.1} parent=11 // pred_check_branch
          %195 = sbr.rel (%p193) target = $region24
        $region23: #{tpu_custom_call.1} parent=11 // pred_region
          %s197 = ssub.s32 512, 512
          %198 = vsyncadd [#allocation9], %s197
          %s199 = sshll.u32 [#allocation8], 4
          %s200 = int_to_ptr.vmem [resolvable:$true] %s199
          %205 = dma.hbm_to_vmem [thread:$0]  %s3, 512, %s200, [#allocation9], 256, 256, 16
        $region24: #{tpu_custom_call.1} parent=11 // pred_fallthru
          _
        // Predicated region
        $region25: #{tpu_custom_call.1} parent=11 // pred_check
          %p206 = pneg %p138
        $region26: #{tpu_custom_call.1} parent=11 // pred_check_branch
          %208 = sbr.rel (%p206) target = $region28
        $region27: #{tpu_custom_call.1} parent=11 // pred_region
          %s210 = ssub.s32 6400, 6400
          %211 = vsyncadd [#allocation9], %s210
          %s212 = sshll.u32 [#allocation10], 4
          %s213 = int_to_ptr.vmem [resolvable:$true] %s212
          %218 = dma.hbm_to_vmem [thread:$0]  %s4, 6400, %s213, [#allocation9], 256, 256, 16
        $region28: #{tpu_custom_call.1} parent=11 // pred_fallthru
          _
      $region12: #{tpu_custom_call.1} parent=5 // pred_fallthru
        _
      %p219 = scmp.lt.s32.totalorder %s16, 4
      // Predicated region
      $region29: #{tpu_custom_call.1} parent=5 // pred_check
        %p220 = pneg %p219
      $region30: #{tpu_custom_call.1} parent=5 // pred_check_branch
        %222 = sbr.rel (%p220) target = $region32
      $region31: #{tpu_custom_call.1} parent=5 // pred_region
        // Predicated region
        $region33: #{tpu_custom_call.1} parent=31 // pred_check
          %p223 = pneg %p48
        $region34: #{tpu_custom_call.1} parent=31 // pred_check_branch
          %225 = sbr.rel (%p223) target = $region36
        $region35: #{tpu_custom_call.1} parent=31 // pred_region
          %s226 = sand.u32 %s38, 1
          %s227 = scalar_lea.sflag [#allocation5], %s226
          %s228 = sand.u32 %s38, 1
          %s229 = smul.addr %s228, 128
          %s230 = scalar_lea.vmem [#allocation4], %s229
          %s232 = ssub.s32 2048, 2048
          %233 = vsyncadd %s227, %s232
          %s234 = smul.addr %s23, 16
          %s235 = smul.addr %s234, 128
          %s236 = scalar_lea.hbm %s0, %s235
          %s237 = sshll.u32 %s230, 4
          %s238 = int_to_ptr.vmem [resolvable:$true] %s237
          %243 = dma.hbm_to_vmem [thread:$0]  %s236, 2048, %s238, %s227, 128, 128, 8
        $region36: #{tpu_custom_call.1} parent=31 // pred_fallthru
          _
      $region32: #{tpu_custom_call.1} parent=5 // pred_fallthru
        _
      %p244 = scmp.le.s32.totalorder 1, %s16
      %p245 = scmp.lt.s32.totalorder %s16, 5
      %p246 = pnand %p244, %p245
      %p247 = pneg %p246
      // Predicated region
      $region37: #{tpu_custom_call.1} parent=5 // pred_check
        _
      $region38: #{tpu_custom_call.1} parent=5 // pred_check_branch
        %249 = sbr.rel (%p246) target = $region40
      $region39: #{tpu_custom_call.1} parent=5 // pred_region
        %s250 = ssub.s32 %s16, 1
        %s251 = sand.u32 %s41, 1
        %s252 = scalar_lea.sflag [#allocation5], %s251
        %s253 = sand.u32 %s41, 1
        %s254 = smul.addr %s253, 128
        %s255 = scalar_lea.vmem [#allocation4], %s254
        // Predicated region
        $region41: #{tpu_custom_call.1} parent=39 // pred_check
          %p256 = pneg %p54
        $region42: #{tpu_custom_call.1} parent=39 // pred_check_branch
          %258 = sbr.rel (%p256) target = $region44
        $region43: #{tpu_custom_call.1} parent=39 // pred_region
          %259 = dma.done %s252, 2048
        $region44: #{tpu_custom_call.1} parent=39 // pred_fallthru
          _
        // Predicated region
        $region45: #{tpu_custom_call.1} parent=39 // pred_check
          %p260 = pneg %p75
        $region46: #{tpu_custom_call.1} parent=39 // pred_check_branch
          %262 = sbr.rel (%p260) target = $region48
        $region47: #{tpu_custom_call.1} parent=39 // pred_region
          %263 = dma.done [#allocation6], 64
        $region48: #{tpu_custom_call.1} parent=39 // pred_fallthru
          _
        // Predicated region
        $region49: #{tpu_custom_call.1} parent=39 // pred_check
          %p264 = pneg %p117
        $region50: #{tpu_custom_call.1} parent=39 // pred_check_branch
          %266 = sbr.rel (%p264) target = $region52
        $region51: #{tpu_custom_call.1} parent=39 // pred_region
          %267 = dma.done [#allocation9], 512
        $region52: #{tpu_custom_call.1} parent=39 // pred_fallthru
          _
        // Predicated region
        $region53: #{tpu_custom_call.1} parent=39 // pred_check
          %p268 = pneg %p138
        $region54: #{tpu_custom_call.1} parent=39 // pred_check_branch
          %270 = sbr.rel (%p268) target = $region56
        $region55: #{tpu_custom_call.1} parent=39 // pred_region
          %271 = dma.done [#allocation9], 6400
        $region56: #{tpu_custom_call.1} parent=39 // pred_fallthru
          _
        %272 = sfence
        %s273 = sand.u32 %s41, 1
        %s274 = scalar_lea.sflag [#allocation5], %s273
        %s275 = sand.u32 %s41, 1
        %s276 = smul.addr %s275, 128
        %s277 = scalar_lea.vmem [#allocation4], %s276
        %p278 = pneg %p54
        %p279 = pneg %p51
        %p280 = pneg %p75
        %p281 = pneg %p72
        %p282 = pneg %p96
        %p283 = pneg %p93
        %p284 = pneg %p117
        %p285 = pneg %p114
        %p286 = pneg %p138
        %p287 = pneg %p135
        %p288 = pneg %p166
        %p289 = pneg %p163
        %s290 = smul.u32 50, %s26
        %p291 = scmp.lt.s32.totalorder %s25, 1
        %s292 = scalar_select %p291, %s25, 1
        %p293 = scmp.lt.s32.totalorder %s290, 99
        %s294 = scalar_select %p293, %s290, 99
        %s295 = smul.addr %s294, 2
        %s296 = smul.addr %s292, 200
        %s297 = sadd.s32 %s295, %s296
        %s298 = smul.addr %s297, 8
        %s299 = scalar_lea.vmem %s5, %s298
        %s300 = smul.u32 50, %s26
        %p301 = scmp.lt.s32.totalorder %s25, 1
        %s302 = scalar_select %p301, %s25, 1
        %p303 = scmp.lt.s32.totalorder %s300, 99
        %s304 = scalar_select %p303, %s300, 99
        %s305 = smul.addr %s304, 2
        %s306 = smul.addr %s302, 200
        %s307 = sadd.s32 %s305, %s306
        %s308 = smul.addr %s307, 8
        %s309 = scalar_lea.vmem %s5, %s308
        %s310 = smul.u32 50, %s26
        %s311 = sld [smem:[#allocation7]]
        %v312 = vld [vmem:[%s255] sm:$0xff]
        %v313 = vld [vmem:[%s255 + $0x8] sm:$0xff]
        %v314 = vstv %s311
        %v315 = vmul.f32 %v314, %v312
        %v316 = vmul.f32 %v314, %v313
        %s317 = sld [smem:[#allocation7 + $0x1]]
        %s318 = scalar_lea.vmem %s255, 16 [#allocation4]
        %v319 = vld [vmem:[%s318] sm:$0xff]
        %v320 = vld [vmem:[%s318 + $0x8] sm:$0xff]
        %v321 = vstv %s317
        %v322 = vmul.f32 %v321, %v319
        %v323 = vmul.f32 %v321, %v320
        %v324 = vadd.f32 %v315, %v322
        %v325 = vadd.f32 %v316, %v323
        %s326 = sld [smem:[#allocation7 + $0x2]]
        %s327 = scalar_lea.vmem %s255, 32 [#allocation4]
        %v328 = vld [vmem:[%s327] sm:$0xff]
        %v329 = vld [vmem:[%s327 + $0x8] sm:$0xff]
        %v330 = vstv %s326
        %v331 = vmul.f32 %v330, %v328
        %v332 = vmul.f32 %v330, %v329
        %v333 = vadd.f32 %v324, %v331
        %v334 = vadd.f32 %v325, %v332
        %s335 = sld [smem:[#allocation7 + $0x3]]
        %s336 = scalar_lea.vmem %s255, 48 [#allocation4]
        %v337 = vld [vmem:[%s336] sm:$0xff]
        %v338 = vld [vmem:[%s336 + $0x8] sm:$0xff]
        %v339 = vstv %s335
        %v340 = vmul.f32 %v339, %v337
        %v341 = vmul.f32 %v339, %v338
        %v342 = vadd.f32 %v333, %v340
        %v343 = vadd.f32 %v334, %v341
        %s344 = sld [smem:[#allocation7 + $0x4]]
        %s345 = scalar_lea.vmem %s255, 64 [#allocation4]
        %v346 = vld [vmem:[%s345] sm:$0xff]
        %v347 = vld [vmem:[%s345 + $0x8] sm:$0xff]
        %v348 = vstv %s344
        %v349 = vmul.f32 %v348, %v346
        %v350 = vmul.f32 %v348, %v347
        %v351 = vadd.f32 %v342, %v349
        %v352 = vadd.f32 %v343, %v350
        %s353 = sld [smem:[#allocation7 + $0x5]]
        %s354 = scalar_lea.vmem %s255, 80 [#allocation4]
        %v355 = vld [vmem:[%s354] sm:$0xff]
        %v356 = vld [vmem:[%s354 + $0x8] sm:$0xff]
        %v357 = vstv %s353
        %v358 = vmul.f32 %v357, %v355
        %v359 = vmul.f32 %v357, %v356
        %v360 = vadd.f32 %v351, %v358
        %v361 = vadd.f32 %v352, %v359
        %s362 = sld [smem:[#allocation7 + $0x6]]
        %s363 = scalar_lea.vmem %s255, 96 [#allocation4]
        %v364 = vld [vmem:[%s363] sm:$0xff]
        %v365 = vld [vmem:[%s363 + $0x8] sm:$0xff]
        %v366 = vstv %s362
        %v367 = vmul.f32 %v366, %v364
        %v368 = vmul.f32 %v366, %v365
        %v369 = vadd.f32 %v360, %v367
        %v370 = vadd.f32 %v361, %v368
        %s371 = sld [smem:[#allocation7 + $0x7]]
        %s372 = scalar_lea.vmem %s255, 112 [#allocation4]
        %v373 = vld [vmem:[%s372] sm:$0xff]
        %v374 = vld [vmem:[%s372 + $0x8] sm:$0xff]
        %v375 = vstv %s371
        %v376 = vmul.f32 %v375, %v373
        %v377 = vmul.f32 %v375, %v374
        %v378 = vadd.f32 %v369, %v376
        %v379 = vadd.f32 %v370, %v377
        %s380 = sld [smem:[#allocation7 + $0x80]]
        %v381 = vstv %s380
        %v382 = vmul.f32 %v381, %v312
        %v383 = vmul.f32 %v381, %v313
        %s384 = sld [smem:[#allocation7 + $0x81]]
        %v385 = vstv %s384
        %v386 = vmul.f32 %v385, %v319
        %v387 = vmul.f32 %v385, %v320
        %v388 = vadd.f32 %v382, %v386
        %v389 = vadd.f32 %v383, %v387
        %s390 = sld [smem:[#allocation7 + $0x82]]
        %v391 = vstv %s390
        %v392 = vmul.f32 %v391, %v328
        %v393 = vmul.f32 %v391, %v329
        %v394 = vadd.f32 %v388, %v392
        %v395 = vadd.f32 %v389, %v393
        %s396 = sld [smem:[#allocation7 + $0x83]]
        %v397 = vstv %s396
        %v398 = vmul.f32 %v397, %v337
        %v399 = vmul.f32 %v397, %v338
        %v400 = vadd.f32 %v394, %v398
        %v401 = vadd.f32 %v395, %v399
        %s402 = sld [smem:[#allocation7 + $0x84]]
        %v403 = vstv %s402
        %v404 = vmul.f32 %v403, %v346
        %v405 = vmul.f32 %v403, %v347
        %v406 = vadd.f32 %v400, %v404
        %v407 = vadd.f32 %v401, %v405
        %s408 = sld [smem:[#allocation7 + $0x85]]
        %v409 = vstv %s408
        %v410 = vmul.f32 %v409, %v355
        %v411 = vmul.f32 %v409, %v356
        %v412 = vadd.f32 %v406, %v410
        %v413 = vadd.f32 %v407, %v411
        %s414 = sld [smem:[#allocation7 + $0x86]]
        %v415 = vstv %s414
        %v416 = vmul.f32 %v415, %v364
        %v417 = vmul.f32 %v415, %v365
        %v418 = vadd.f32 %v412, %v416
        %v419 = vadd.f32 %v413, %v417
        %s420 = sld [smem:[#allocation7 + $0x87]]
        %v421 = vstv %s420
        %v422 = vmul.f32 %v421, %v373
        %v423 = vmul.f32 %v421, %v374
        %v424 = vadd.f32 %v418, %v422
        %v425 = vadd.f32 %v419, %v423
        %s426 = sld [smem:[#allocation7 + $0x100]]
        %v427 = vstv %s426
        %v428 = vmul.f32 %v427, %v312
        %v429 = vmul.f32 %v427, %v313
        %s430 = sld [smem:[#allocation7 + $0x101]]
        %v431 = vstv %s430
        %v432 = vmul.f32 %v431, %v319
        %v433 = vmul.f32 %v431, %v320
        %v434 = vadd.f32 %v428, %v432
        %v435 = vadd.f32 %v429, %v433
        %s436 = sld [smem:[#allocation7 + $0x102]]
        %v437 = vstv %s436
        %v438 = vmul.f32 %v437, %v328
        %v439 = vmul.f32 %v437, %v329
        %v440 = vadd.f32 %v434, %v438
        %v441 = vadd.f32 %v435, %v439
        %s442 = sld [smem:[#allocation7 + $0x103]]
        %v443 = vstv %s442
        %v444 = vmul.f32 %v443, %v337
        %v445 = vmul.f32 %v443, %v338
        %v446 = vadd.f32 %v440, %v444
        %v447 = vadd.f32 %v441, %v445
        %s448 = sld [smem:[#allocation7 + $0x104]]
        %v449 = vstv %s448
        %v450 = vmul.f32 %v449, %v346
        %v451 = vmul.f32 %v449, %v347
        %v452 = vadd.f32 %v446, %v450
        %v453 = vadd.f32 %v447, %v451
        %s454 = sld [smem:[#allocation7 + $0x105]]
        %v455 = vstv %s454
        %v456 = vmul.f32 %v455, %v355
        %v457 = vmul.f32 %v455, %v356
        %v458 = vadd.f32 %v452, %v456
        %v459 = vadd.f32 %v453, %v457
        %s460 = sld [smem:[#allocation7 + $0x106]]
        %v461 = vstv %s460
        %v462 = vmul.f32 %v461, %v364
        %v463 = vmul.f32 %v461, %v365
        %v464 = vadd.f32 %v458, %v462
        %v465 = vadd.f32 %v459, %v463
        %s466 = sld [smem:[#allocation7 + $0x107]]
        %v467 = vstv %s466
        %v468 = vmul.f32 %v467, %v373
        %v469 = vmul.f32 %v467, %v374
        %v470 = vadd.f32 %v464, %v468
        %v471 = vadd.f32 %v465, %v469
        %s472 = sld [smem:[#allocation7 + $0x180]]
        %v473 = vstv %s472
        %v474 = vmul.f32 %v473, %v312
        %v475 = vmul.f32 %v473, %v313
        %s476 = sld [smem:[#allocation7 + $0x181]]
        %v477 = vstv %s476
        %v478 = vmul.f32 %v477, %v319
        %v479 = vmul.f32 %v477, %v320
        %v480 = vadd.f32 %v474, %v478
        %v481 = vadd.f32 %v475, %v479
        %s482 = sld [smem:[#allocation7 + $0x182]]
        %v483 = vstv %s482
        %v484 = vmul.f32 %v483, %v328
        %v485 = vmul.f32 %v483, %v329
        %v486 = vadd.f32 %v480, %v484
        %v487 = vadd.f32 %v481, %v485
        %s488 = sld [smem:[#allocation7 + $0x183]]
        %v489 = vstv %s488
        %v490 = vmul.f32 %v489, %v337
        %v491 = vmul.f32 %v489, %v338
        %v492 = vadd.f32 %v486, %v490
        %v493 = vadd.f32 %v487, %v491
        %s494 = sld [smem:[#allocation7 + $0x184]]
        %v495 = vstv %s494
        %v496 = vmul.f32 %v495, %v346
        %v497 = vmul.f32 %v495, %v347
        %v498 = vadd.f32 %v492, %v496
        %v499 = vadd.f32 %v493, %v497
        %s500 = sld [smem:[#allocation7 + $0x185]]
        %v501 = vstv %s500
        %v502 = vmul.f32 %v501, %v355
        %v503 = vmul.f32 %v501, %v356
        %v504 = vadd.f32 %v498, %v502
        %v505 = vadd.f32 %v499, %v503
        %s506 = sld [smem:[#allocation7 + $0x186]]
        %v507 = vstv %s506
        %v508 = vmul.f32 %v507, %v364
        %v509 = vmul.f32 %v507, %v365
        %v510 = vadd.f32 %v504, %v508
        %v511 = vadd.f32 %v505, %v509
        %s512 = sld [smem:[#allocation7 + $0x187]]
        %v513 = vstv %s512
        %v514 = vmul.f32 %v513, %v373
        %v515 = vmul.f32 %v513, %v374
        %v516 = vadd.f32 %v510, %v514
        %v517 = vadd.f32 %v511, %v515
        %v518 = vmax.f32 %v378, %v424
        %v519 = vmax.f32 %v379, %v425
        %v520 = vmax.f32 %v518, %v470
        %v521 = vmax.f32 %v519, %v471
        %v522 = vmax.f32 %v520, %v516
        %v523 = vmax.f32 %v521, %v517
        %v524 = vsub.f32 %v378, %v522
        %v525 = vsub.f32 %v379, %v523
        %v526 = vmul.f32 %v524, 1.442695
        %v527 = vpow.pop %v526
        %v528 = vmul.f32 %v525, 1.442695
        %v529 = vpow.pop %v528
        %v530 = vsub.f32 %v424, %v522
        %v531 = vsub.f32 %v425, %v523
        %v532 = vmul.f32 %v530, 1.442695
        %v533 = vpow.pop %v532
        %v534 = vmul.f32 %v531, 1.442695
        %v535 = vpow.pop %v534
        %v536 = vsub.f32 %v470, %v522
        %v537 = vsub.f32 %v471, %v523
        %v538 = vmul.f32 %v536, 1.442695
        %v539 = vpow.pop %v538
        %v540 = vmul.f32 %v537, 1.442695
        %v541 = vpow.pop %v540
        %v542 = vsub.f32 %v516, %v522
        %v543 = vsub.f32 %v517, %v523
        %v544 = vmul.f32 %v542, 1.442695
        %v545 = vpow.pop %v544
        %v546 = vmul.f32 %v543, 1.442695
        %v547 = vpow.pop %v546
        %v548 = vadd.f32 %v527, %v533
        %v549 = vadd.f32 %v529, %v535
        %v550 = vadd.f32 %v548, %v539
        %v551 = vadd.f32 %v549, %v541
        %v552 = vadd.f32 %v550, %v545
        %v553 = vadd.f32 %v551, %v547
        %v554 = vrcp.pop %v552
        %v555 = vmul.f32 1.0, %v554
        %v556 = vrcp.pop %v553
        %v557 = vmul.f32 1.0, %v556
        %v558 = vmul.f32 %v527, %v555
        %v559 = vmul.f32 %v529, %v557
        %vm560 = vcmask 130048
        %561 = vst.msk [vmem:[#allocation2] sm:$0xff] %vm560, %v558
        %562 = vst.msk [vmem:[#allocation2 + $0x8] sm:$0xff] %vm560, %v559
        %v563 = vmul.f32 %v533, %v555
        %v564 = vmul.f32 %v535, %v557
        %s565 = scalar_lea.vmem [#allocation2], 16
        %566 = vst.msk [vmem:[%s565] sm:$0xff] %vm560, %v563
        %567 = vst.msk [vmem:[%s565 + $0x8] sm:$0xff] %vm560, %v564
        %v568 = vmul.f32 %v539, %v555
        %v569 = vmul.f32 %v541, %v557
        %s570 = scalar_lea.vmem [#allocation2], 32
        %571 = vst.msk [vmem:[%s570] sm:$0xff] %vm560, %v568
        %572 = vst.msk [vmem:[%s570 + $0x8] sm:$0xff] %vm560, %v569
        %v573 = vmul.f32 %v545, %v555
        %v574 = vmul.f32 %v547, %v557
        %s575 = scalar_lea.vmem [#allocation2], 48
        %576 = vst.msk [vmem:[%s575] sm:$0xff] %vm560, %v573
        %577 = vst.msk [vmem:[%s575 + $0x8] sm:$0xff] %vm560, %v574
        %v578 = vld [vmem:[%s2] sm:$0xff]
        %v579 = vld [vmem:[%s2 + $0x8] sm:$0xff]
        %v580 = vld [vmem:[%s2 + $0x10] sm:$0xff]
        %v581 = vld [vmem:[%s2 + $0x18] sm:$0xff]
        %v582 = vld [vmem:[%s2 + $0x20] sm:$0xff]
        %v583 = vld [vmem:[%s2 + $0x28] sm:$0xff]
        %v584 = vld [vmem:[%s2 + $0x30] sm:$0xff]
        %v585 = vld [vmem:[%s2 + $0x38] sm:$0xff]
        %v586 = vld [vmem:[%s2 + $0x40] sm:$0xff]
        %v587 = vld [vmem:[%s2 + $0x48] sm:$0xff]
        %v588 = vld [vmem:[%s2 + $0x50] sm:$0xff]
        %v589 = vld [vmem:[%s2 + $0x58] sm:$0xff]
        %v590 = vld [vmem:[%s2 + $0x60] sm:$0xff]
        %v591 = vld [vmem:[%s2 + $0x68] sm:$0xff]
        %v592 = vld [vmem:[%s2 + $0x70] sm:$0xff]
        %v593 = vld [vmem:[%s2 + $0x78] sm:$0xff]
        %v594 = vld [vmem:[%s2 + $0x80] sm:$0xff]
        %v595 = vld [vmem:[%s2 + $0x88] sm:$0xff]
        %v596 = vld [vmem:[%s2 + $0x90] sm:$0xff]
        %v597 = vld [vmem:[%s2 + $0x98] sm:$0xff]
        %v598 = vld [vmem:[%s2 + $0xa0] sm:$0xff]
        %v599 = vld [vmem:[%s2 + $0xa8] sm:$0xff]
        %v600 = vld [vmem:[%s2 + $0xb0] sm:$0xff]
        %v601 = vld [vmem:[%s2 + $0xb8] sm:$0xff]
        %v602 = vld [vmem:[%s2 + $0xc0] sm:$0xff]
        %s603 = smul.u32 %s26, 2
        %s604 = smul.u32 %s603, 16
        %s605 = scalar_lea.vmem [#allocation2], %s604
        %v606 = vld [vmem:[%s605] sm:$0xff]
        %v607 = vld [vmem:[%s605 + $0x8] sm:$0xff]
        %v609 = vsel %vm560, %v578, 0
        %v612 = vsel %vm560, %v579, 0
        %v615 = vsel %vm560, %v580, 0
        %v618 = vsel %vm560, %v581, 0
        %v621 = vsel %vm560, %v582, 0
        %v624 = vsel %vm560, %v583, 0
        %v627 = vsel %vm560, %v584, 0
        %v630 = vsel %vm560, %v585, 0
        %v633 = vsel %vm560, %v586, 0
        %v636 = vsel %vm560, %v587, 0
        %v639 = vsel %vm560, %v588, 0
        %v642 = vsel %vm560, %v589, 0
        %v645 = vsel %vm560, %v590, 0
        %v648 = vsel %vm560, %v591, 0
        %v651 = vsel %vm560, %v592, 0
        %v654 = vsel %vm560, %v593, 0
        %v657 = vsel %vm560, %v594, 0
        %v660 = vsel %vm560, %v595, 0
        %v663 = vsel %vm560, %v596, 0
        %v666 = vsel %vm560, %v597, 0
        %v669 = vsel %vm560, %v598, 0
        %v672 = vsel %vm560, %v599, 0
        %v675 = vsel %vm560, %v600, 0
        %v678 = vsel %vm560, %v601, 0
        %v681 = vsel %vm560, %v602, 0
        %683 = vmatprep.subr.mxu0 0.0
        %684 = vmatpush1.msra.mxu0 0.0
        %685 = vmatprep.subr.mxu0 0.0
        %686 = vmatpush1.msra.mxu0 0.0
        %687 = vmatprep.subr.mxu0 0.0
        %688 = vmatpush1.msra.mxu0 0.0
        %689 = vmatprep.subr.mxu0 0.0
        %690 = vmatpush1.msra.mxu0 0.0
        %691 = vmatprep.subr.mxu0 0.0
        %692 = vmatpush1.msra.mxu0 0.0
        %693 = vmatprep.subr.mxu0 0.0
        %694 = vmatpush1.msra.mxu0 0.0
        %695 = vmatprep.subr.mxu0 0.0
        %696 = vmatpush1.msra.mxu0 0.0
        %697 = vmatprep.subr.mxu0 0.0
        %698 = vmatpush1.msra.mxu0 0.0
        %699 = vmatprep.subr.mxu0 0.0
        %700 = vmatpush1.msra.mxu0 0.0
        %701 = vmatprep.subr.mxu0 0.0
        %702 = vmatpush1.msra.mxu0 0.0
        %703 = vmatprep.subr.mxu0 0.0
        %704 = vmatpush1.msra.mxu0 0.0
        %705 = vmatprep.subr.mxu0 0.0
        %706 = vmatpush1.msra.mxu0 0.0
        %707 = vmatprep.subr.mxu0 0.0
        %708 = vmatpush1.msra.mxu0 0.0
        %709 = vmatprep.subr.mxu0 0.0
        %710 = vmatpush1.msra.mxu0 0.0
        %711 = vmatprep.subr.mxu0 0.0
        %712 = vmatpush1.msra.mxu0 %v607
        %713 = vmatprep.subr.mxu0 0.0
        %714 = vmatpush1.msra.mxu0 %v606
        %715 = vmatprep.subr.mxu0 0.0
        %716 = vmatpush2.msra.mxu0 0.0
        %717 = vmatprep.subr.mxu0 0.0
        %718 = vmatpush2.msra.mxu0 0.0
        %719 = vmatprep.subr.mxu0 0.0
        %720 = vmatpush2.msra.mxu0 0.0
        %721 = vmatprep.subr.mxu0 0.0
        %722 = vmatpush2.msra.mxu0 0.0
        %723 = vmatprep.subr.mxu0 0.0
        %724 = vmatpush2.msra.mxu0 0.0
        %725 = vmatprep.subr.mxu0 0.0
        %726 = vmatpush2.msra.mxu0 0.0
        %727 = vmatprep.subr.mxu0 0.0
        %728 = vmatpush2.msra.mxu0 0.0
        %729 = vmatprep.subr.mxu0 0.0
        %730 = vmatpush2.msra.mxu0 0.0
        %731 = vmatprep.subr.mxu0 0.0
        %732 = vmatpush2.msra.mxu0 0.0
        %733 = vmatprep.subr.mxu0 0.0
        %734 = vmatpush2.msra.mxu0 0.0
        %735 = vmatprep.subr.mxu0 0.0
        %736 = vmatpush2.msra.mxu0 0.0
        %737 = vmatprep.subr.mxu0 0.0
        %738 = vmatpush2.msra.mxu0 0.0
        %739 = vmatprep.subr.mxu0 0.0
        %740 = vmatpush2.msra.mxu0 0.0
        %741 = vmatprep.subr.mxu0 0.0
        %742 = vmatpush2.msra.mxu0 0.0
        %743 = vmatprep.subr.mxu0 0.0
        %744 = vmatpush2.msra.mxu0 0.0
        %745 = vmatprep.subr.mxu0 0.0
        %746 = vmatpush2.msra.mxu0 0.0
        %747 = vmatprep.mubr.f32.mxu0 0.0
        %748 = vmatmul.mubr.f32.gmra.mxu0 %v609
        %v749 = vpop.f32.mrf.mxu0
        %v750 = vadd.f32 0.0, %v749
        %v751 = vpop.f32.mrf.mxu0
        %752 = vmatprep.mubr.f32.mxu0 0.0
        %753 = vmatmul.mubr.f32.gmra.mxu0 %v612
        %v754 = vpop.f32.mrf.mxu0
        %v755 = vadd.f32 0.0, %v754
        %v756 = vpop.f32.mrf.mxu0
        %757 = vmatprep.mubr.f32.mxu0 0.0
        %758 = vmatmul.mubr.f32.gmra.mxu0 %v615
        %v759 = vpop.f32.mrf.mxu0
        %v760 = vadd.f32 0.0, %v759
        %v761 = vpop.f32.mrf.mxu0
        %762 = vmatprep.mubr.f32.mxu0 0.0
        %763 = vmatmul.mubr.f32.gmra.mxu0 %v618
        %v764 = vpop.f32.mrf.mxu0
        %v765 = vadd.f32 0.0, %v764
        %v766 = vpop.f32.mrf.mxu0
        %767 = vmatprep.mubr.f32.mxu0 0.0
        %768 = vmatmul.mubr.f32.gmra.mxu0 %v621
        %v769 = vpop.f32.mrf.mxu0
        %v770 = vadd.f32 0.0, %v769
        %v771 = vpop.f32.mrf.mxu0
        %772 = vmatprep.mubr.f32.mxu0 0.0
        %773 = vmatmul.mubr.f32.gmra.mxu0 %v624
        %v774 = vpop.f32.mrf.mxu0
        %v775 = vadd.f32 0.0, %v774
        %v776 = vpop.f32.mrf.mxu0
        %777 = vmatprep.mubr.f32.mxu0 0.0
        %778 = vmatmul.mubr.f32.gmra.mxu0 %v627
        %v779 = vpop.f32.mrf.mxu0
        %v780 = vadd.f32 0.0, %v779
        %v781 = vpop.f32.mrf.mxu0
        %782 = vmatprep.mubr.f32.mxu0 0.0
        %783 = vmatmul.mubr.f32.gmra.mxu0 %v630
        %v784 = vpop.f32.mrf.mxu0
        %v785 = vadd.f32 0.0, %v784
        %v786 = vpop.f32.mrf.mxu0
        %787 = vmatprep.mubr.f32.mxu0 0.0
        %788 = vmatmul.mubr.f32.gmra.mxu0 %v633
        %v789 = vpop.f32.mrf.mxu0
        %v790 = vadd.f32 0.0, %v789
        %v791 = vpop.f32.mrf.mxu0
        %792 = vmatprep.mubr.f32.mxu0 0.0
        %793 = vmatmul.mubr.f32.gmra.mxu0 %v636
        %v794 = vpop.f32.mrf.mxu0
        %v795 = vadd.f32 0.0, %v794
        %v796 = vpop.f32.mrf.mxu0
        %797 = vmatprep.mubr.f32.mxu0 0.0
        %798 = vmatmul.mubr.f32.gmra.mxu0 %v639
        %v799 = vpop.f32.mrf.mxu0
        %v800 = vadd.f32 0.0, %v799
        %v801 = vpop.f32.mrf.mxu0
        %802 = vmatprep.mubr.f32.mxu0 0.0
        %803 = vmatmul.mubr.f32.gmra.mxu0 %v642
        %v804 = vpop.f32.mrf.mxu0
        %v805 = vadd.f32 0.0, %v804
        %v806 = vpop.f32.mrf.mxu0
        %807 = vmatprep.mubr.f32.mxu0 0.0
        %808 = vmatmul.mubr.f32.gmra.mxu0 %v645
        %v809 = vpop.f32.mrf.mxu0
        %v810 = vadd.f32 0.0, %v809
        %v811 = vpop.f32.mrf.mxu0
        %812 = vmatprep.mubr.f32.mxu0 0.0
        %813 = vmatmul.mubr.f32.gmra.mxu0 %v648
        %v814 = vpop.f32.mrf.mxu0
        %v815 = vadd.f32 0.0, %v814
        %v816 = vpop.f32.mrf.mxu0
        %817 = vmatprep.mubr.f32.mxu0 0.0
        %818 = vmatmul.mubr.f32.gmra.mxu0 %v651
        %v819 = vpop.f32.mrf.mxu0
        %v820 = vadd.f32 0.0, %v819
        %v821 = vpop.f32.mrf.mxu0
        %822 = vmatprep.mubr.f32.mxu0 0.0
        %823 = vmatmul.mubr.f32.gmra.mxu0 %v654
        %v824 = vpop.f32.mrf.mxu0
        %v825 = vadd.f32 0.0, %v824
        %v826 = vpop.f32.mrf.mxu0
        %827 = vmatprep.mubr.f32.mxu0 0.0
        %828 = vmatmul.mubr.f32.gmra.mxu0 %v657
        %v829 = vpop.f32.mrf.mxu0
        %v830 = vadd.f32 0.0, %v829
        %v831 = vpop.f32.mrf.mxu0
        %832 = vmatprep.mubr.f32.mxu0 0.0
        %833 = vmatmul.mubr.f32.gmra.mxu0 %v660
        %v834 = vpop.f32.mrf.mxu0
        %v835 = vadd.f32 0.0, %v834
        %v836 = vpop.f32.mrf.mxu0
        %837 = vmatprep.mubr.f32.mxu0 0.0
        %838 = vmatmul.mubr.f32.gmra.mxu0 %v663
        %v839 = vpop.f32.mrf.mxu0
        %v840 = vadd.f32 0.0, %v839
        %v841 = vpop.f32.mrf.mxu0
        %842 = vmatprep.mubr.f32.mxu0 0.0
        %843 = vmatmul.mubr.f32.gmra.mxu0 %v666
        %v844 = vpop.f32.mrf.mxu0
        %v845 = vadd.f32 0.0, %v844
        %v846 = vpop.f32.mrf.mxu0
        %847 = vmatprep.mubr.f32.mxu0 0.0
        %848 = vmatmul.mubr.f32.gmra.mxu0 %v669
        %v849 = vpop.f32.mrf.mxu0
        %v850 = vadd.f32 0.0, %v849
        %v851 = vpop.f32.mrf.mxu0
        %852 = vmatprep.mubr.f32.mxu0 0.0
        %853 = vmatmul.mubr.f32.gmra.mxu0 %v672
        %v854 = vpop.f32.mrf.mxu0
        %v855 = vadd.f32 0.0, %v854
        %v856 = vpop.f32.mrf.mxu0
        %857 = vmatprep.mubr.f32.mxu0 0.0
        %858 = vmatmul.mubr.f32.gmra.mxu0 %v675
        %v859 = vpop.f32.mrf.mxu0
        %v860 = vadd.f32 0.0, %v859
        %v861 = vpop.f32.mrf.mxu0
        %862 = vmatprep.mubr.f32.mxu0 0.0
        %863 = vmatmul.mubr.f32.gmra.mxu0 %v678
        %v864 = vpop.f32.mrf.mxu0
        %v865 = vadd.f32 0.0, %v864
        %v866 = vpop.f32.mrf.mxu0
        %867 = vmatprep.mubr.f32.mxu0 0.0
        %868 = vmatmul.mubr.f32.gmra.mxu0 %v681
        %v869 = vpop.f32.mrf.mxu0
        %v870 = vadd.f32 0.0, %v869
        %v871 = vpop.f32.mrf.mxu0
        %872 = vdwg.mxu0
        %873 = vst.msk [vmem:[#allocation3] sm:$0xff] %vm560, %v750
        %874 = vst.msk [vmem:[#allocation3 + $0x8] sm:$0xff] %vm560, %v755
        %875 = vst.msk [vmem:[#allocation3 + $0x10] sm:$0xff] %vm560, %v760
        %876 = vst.msk [vmem:[#allocation3 + $0x18] sm:$0xff] %vm560, %v765
        %877 = vst.msk [vmem:[#allocation3 + $0x20] sm:$0xff] %vm560, %v770
        %878 = vst.msk [vmem:[#allocation3 + $0x28] sm:$0xff] %vm560, %v775
        %879 = vst.msk [vmem:[#allocation3 + $0x30] sm:$0xff] %vm560, %v780
        %880 = vst.msk [vmem:[#allocation3 + $0x38] sm:$0xff] %vm560, %v785
        %881 = vst.msk [vmem:[#allocation3 + $0x40] sm:$0xff] %vm560, %v790
        %882 = vst.msk [vmem:[#allocation3 + $0x48] sm:$0xff] %vm560, %v795
        %883 = vst.msk [vmem:[#allocation3 + $0x50] sm:$0xff] %vm560, %v800
        %884 = vst.msk [vmem:[#allocation3 + $0x58] sm:$0xff] %vm560, %v805
        %885 = vst.msk [vmem:[#allocation3 + $0x60] sm:$0xff] %vm560, %v810
        %886 = vst.msk [vmem:[#allocation3 + $0x68] sm:$0xff] %vm560, %v815
        %887 = vst.msk [vmem:[#allocation3 + $0x70] sm:$0xff] %vm560, %v820
        %888 = vst.msk [vmem:[#allocation3 + $0x78] sm:$0xff] %vm560, %v825
        %889 = vst.msk [vmem:[#allocation3 + $0x80] sm:$0xff] %vm560, %v830
        %890 = vst.msk [vmem:[#allocation3 + $0x88] sm:$0xff] %vm560, %v835
        %891 = vst.msk [vmem:[#allocation3 + $0x90] sm:$0xff] %vm560, %v840
        %892 = vst.msk [vmem:[#allocation3 + $0x98] sm:$0xff] %vm560, %v845
        %893 = vst.msk [vmem:[#allocation3 + $0xa0] sm:$0xff] %vm560, %v850
        %894 = vst.msk [vmem:[#allocation3 + $0xa8] sm:$0xff] %vm560, %v855
        %895 = vst.msk [vmem:[#allocation3 + $0xb0] sm:$0xff] %vm560, %v860
        %896 = vst.msk [vmem:[#allocation3 + $0xb8] sm:$0xff] %vm560, %v865
        %897 = vst.msk [vmem:[#allocation3 + $0xc0] sm:$0xff] %vm560, %v870
        %s898 = sadd.s32 %s603, 1
        %s899 = smul.u32 %s898, 16
        %s900 = scalar_lea.vmem [#allocation2], %s899
        %v901 = vld [vmem:[%s900] sm:$0xff]
        %v902 = vld [vmem:[%s900 + $0x8] sm:$0xff]
        %903 = vmatprep.subr.mxu0 0.0
        %904 = vmatpush1.msra.mxu0 0.0
        %905 = vmatprep.subr.mxu0 0.0
        %906 = vmatpush1.msra.mxu0 0.0
        %907 = vmatprep.subr.mxu0 0.0
        %908 = vmatpush1.msra.mxu0 0.0
        %909 = vmatprep.subr.mxu0 0.0
        %910 = vmatpush1.msra.mxu0 0.0
        %911 = vmatprep.subr.mxu0 0.0
        %912 = vmatpush1.msra.mxu0 0.0
        %913 = vmatprep.subr.mxu0 0.0
        %914 = vmatpush1.msra.mxu0 0.0
        %915 = vmatprep.subr.mxu0 0.0
        %916 = vmatpush1.msra.mxu0 0.0
        %917 = vmatprep.subr.mxu0 0.0
        %918 = vmatpush1.msra.mxu0 0.0
        %919 = vmatprep.subr.mxu0 0.0
        %920 = vmatpush1.msra.mxu0 0.0
        %921 = vmatprep.subr.mxu0 0.0
        %922 = vmatpush1.msra.mxu0 0.0
        %923 = vmatprep.subr.mxu0 0.0
        %924 = vmatpush1.msra.mxu0 0.0
        %925 = vmatprep.subr.mxu0 0.0
        %926 = vmatpush1.msra.mxu0 0.0
        %927 = vmatprep.subr.mxu0 0.0
        %928 = vmatpush1.msra.mxu0 0.0
        %929 = vmatprep.subr.mxu0 0.0
        %930 = vmatpush1.msra.mxu0 0.0
        %931 = vmatprep.subr.mxu0 0.0
        %932 = vmatpush1.msra.mxu0 %v902
        %933 = vmatprep.subr.mxu0 0.0
        %934 = vmatpush1.msra.mxu0 %v901
        %935 = vmatprep.subr.mxu0 0.0
        %936 = vmatpush2.msra.mxu0 0.0
        %937 = vmatprep.subr.mxu0 0.0
        %938 = vmatpush2.msra.mxu0 0.0
        %939 = vmatprep.subr.mxu0 0.0
        %940 = vmatpush2.msra.mxu0 0.0
        %941 = vmatprep.subr.mxu0 0.0
        %942 = vmatpush2.msra.mxu0 0.0
        %943 = vmatprep.subr.mxu0 0.0
        %944 = vmatpush2.msra.mxu0 0.0
        %945 = vmatprep.subr.mxu0 0.0
        %946 = vmatpush2.msra.mxu0 0.0
        %947 = vmatprep.subr.mxu0 0.0
        %948 = vmatpush2.msra.mxu0 0.0
        %949 = vmatprep.subr.mxu0 0.0
        %950 = vmatpush2.msra.mxu0 0.0
        %951 = vmatprep.subr.mxu0 0.0
        %952 = vmatpush2.msra.mxu0 0.0
        %953 = vmatprep.subr.mxu0 0.0
        %954 = vmatpush2.msra.mxu0 0.0
        %955 = vmatprep.subr.mxu0 0.0
        %956 = vmatpush2.msra.mxu0 0.0
        %957 = vmatprep.subr.mxu0 0.0
        %958 = vmatpush2.msra.mxu0 0.0
        %959 = vmatprep.subr.mxu0 0.0
        %960 = vmatpush2.msra.mxu0 0.0
        %961 = vmatprep.subr.mxu0 0.0
        %962 = vmatpush2.msra.mxu0 0.0
        %963 = vmatprep.subr.mxu0 0.0
        %964 = vmatpush2.msra.mxu0 0.0
        %965 = vmatprep.subr.mxu0 0.0
        %966 = vmatpush2.msra.mxu0 0.0
        %967 = vmatprep.mubr.f32.mxu0 0.0
        %968 = vmatmul.mubr.f32.gmra.mxu0 %v609
        %v969 = vpop.f32.mrf.mxu0
        %v970 = vadd.f32 0.0, %v969
        %v971 = vpop.f32.mrf.mxu0
        %972 = vmatprep.mubr.f32.mxu0 0.0
        %973 = vmatmul.mubr.f32.gmra.mxu0 %v612
        %v974 = vpop.f32.mrf.mxu0
        %v975 = vadd.f32 0.0, %v974
        %v976 = vpop.f32.mrf.mxu0
        %977 = vmatprep.mubr.f32.mxu0 0.0
        %978 = vmatmul.mubr.f32.gmra.mxu0 %v615
        %v979 = vpop.f32.mrf.mxu0
        %v980 = vadd.f32 0.0, %v979
        %v981 = vpop.f32.mrf.mxu0
        %982 = vmatprep.mubr.f32.mxu0 0.0
        %983 = vmatmul.mubr.f32.gmra.mxu0 %v618
        %v984 = vpop.f32.mrf.mxu0
        %v985 = vadd.f32 0.0, %v984
        %v986 = vpop.f32.mrf.mxu0
        %987 = vmatprep.mubr.f32.mxu0 0.0
        %988 = vmatmul.mubr.f32.gmra.mxu0 %v621
        %v989 = vpop.f32.mrf.mxu0
        %v990 = vadd.f32 0.0, %v989
        %v991 = vpop.f32.mrf.mxu0
        %992 = vmatprep.mubr.f32.mxu0 0.0
        %993 = vmatmul.mubr.f32.gmra.mxu0 %v624
        %v994 = vpop.f32.mrf.mxu0
        %v995 = vadd.f32 0.0, %v994
        %v996 = vpop.f32.mrf.mxu0
        %997 = vmatprep.mubr.f32.mxu0 0.0
        %998 = vmatmul.mubr.f32.gmra.mxu0 %v627
        %v999 = vpop.f32.mrf.mxu0
        %v1000 = vadd.f32 0.0, %v999
        %v1001 = vpop.f32.mrf.mxu0
        %1002 = vmatprep.mubr.f32.mxu0 0.0
        %1003 = vmatmul.mubr.f32.gmra.mxu0 %v630
        %v1004 = vpop.f32.mrf.mxu0
        %v1005 = vadd.f32 0.0, %v1004
        %v1006 = vpop.f32.mrf.mxu0
        %1007 = vmatprep.mubr.f32.mxu0 0.0
        %1008 = vmatmul.mubr.f32.gmra.mxu0 %v633
        %v1009 = vpop.f32.mrf.mxu0
        %v1010 = vadd.f32 0.0, %v1009
        %v1011 = vpop.f32.mrf.mxu0
        %1012 = vmatprep.mubr.f32.mxu0 0.0
        %1013 = vmatmul.mubr.f32.gmra.mxu0 %v636
        %v1014 = vpop.f32.mrf.mxu0
        %v1015 = vadd.f32 0.0, %v1014
        %v1016 = vpop.f32.mrf.mxu0
        %1017 = vmatprep.mubr.f32.mxu0 0.0
        %1018 = vmatmul.mubr.f32.gmra.mxu0 %v639
        %v1019 = vpop.f32.mrf.mxu0
        %v1020 = vadd.f32 0.0, %v1019
        %v1021 = vpop.f32.mrf.mxu0
        %1022 = vmatprep.mubr.f32.mxu0 0.0
        %1023 = vmatmul.mubr.f32.gmra.mxu0 %v642
        %v1024 = vpop.f32.mrf.mxu0
        %v1025 = vadd.f32 0.0, %v1024
        %v1026 = vpop.f32.mrf.mxu0
        %1027 = vmatprep.mubr.f32.mxu0 0.0
        %1028 = vmatmul.mubr.f32.gmra.mxu0 %v645
        %v1029 = vpop.f32.mrf.mxu0
        %v1030 = vadd.f32 0.0, %v1029
        %v1031 = vpop.f32.mrf.mxu0
        %1032 = vmatprep.mubr.f32.mxu0 0.0
        %1033 = vmatmul.mubr.f32.gmra.mxu0 %v648
        %v1034 = vpop.f32.mrf.mxu0
        %v1035 = vadd.f32 0.0, %v1034
        %v1036 = vpop.f32.mrf.mxu0
        %1037 = vmatprep.mubr.f32.mxu0 0.0
        %1038 = vmatmul.mubr.f32.gmra.mxu0 %v651
        %v1039 = vpop.f32.mrf.mxu0
        %v1040 = vadd.f32 0.0, %v1039
        %v1041 = vpop.f32.mrf.mxu0
        %1042 = vmatprep.mubr.f32.mxu0 0.0
        %1043 = vmatmul.mubr.f32.gmra.mxu0 %v654
        %v1044 = vpop.f32.mrf.mxu0
        %v1045 = vadd.f32 0.0, %v1044
        %v1046 = vpop.f32.mrf.mxu0
        %1047 = vmatprep.mubr.f32.mxu0 0.0
        %1048 = vmatmul.mubr.f32.gmra.mxu0 %v657
        %v1049 = vpop.f32.mrf.mxu0
        %v1050 = vadd.f32 0.0, %v1049
        %v1051 = vpop.f32.mrf.mxu0
        %1052 = vmatprep.mubr.f32.mxu0 0.0
        %1053 = vmatmul.mubr.f32.gmra.mxu0 %v660
        %v1054 = vpop.f32.mrf.mxu0
        %v1055 = vadd.f32 0.0, %v1054
        %v1056 = vpop.f32.mrf.mxu0
        %1057 = vmatprep.mubr.f32.mxu0 0.0
        %1058 = vmatmul.mubr.f32.gmra.mxu0 %v663
        %v1059 = vpop.f32.mrf.mxu0
        %v1060 = vadd.f32 0.0, %v1059
        %v1061 = vpop.f32.mrf.mxu0
        %1062 = vmatprep.mubr.f32.mxu0 0.0
        %1063 = vmatmul.mubr.f32.gmra.mxu0 %v666
        %v1064 = vpop.f32.mrf.mxu0
        %v1065 = vadd.f32 0.0, %v1064
        %v1066 = vpop.f32.mrf.mxu0
        %1067 = vmatprep.mubr.f32.mxu0 0.0
        %1068 = vmatmul.mubr.f32.gmra.mxu0 %v669
        %v1069 = vpop.f32.mrf.mxu0
        %v1070 = vadd.f32 0.0, %v1069
        %v1071 = vpop.f32.mrf.mxu0
        %1072 = vmatprep.mubr.f32.mxu0 0.0
        %1073 = vmatmul.mubr.f32.gmra.mxu0 %v672
        %v1074 = vpop.f32.mrf.mxu0
        %v1075 = vadd.f32 0.0, %v1074
        %v1076 = vpop.f32.mrf.mxu0
        %1077 = vmatprep.mubr.f32.mxu0 0.0
        %1078 = vmatmul.mubr.f32.gmra.mxu0 %v675
        %v1079 = vpop.f32.mrf.mxu0
        %v1080 = vadd.f32 0.0, %v1079
        %v1081 = vpop.f32.mrf.mxu0
        %1082 = vmatprep.mubr.f32.mxu0 0.0
        %1083 = vmatmul.mubr.f32.gmra.mxu0 %v678
        %v1084 = vpop.f32.mrf.mxu0
        %v1085 = vadd.f32 0.0, %v1084
        %v1086 = vpop.f32.mrf.mxu0
        %1087 = vmatprep.mubr.f32.mxu0 0.0
        %1088 = vmatmul.mubr.f32.gmra.mxu0 %v681
        %v1089 = vpop.f32.mrf.mxu0
        %v1090 = vadd.f32 0.0, %v1089
        %v1091 = vpop.f32.mrf.mxu0
        %1092 = vdwg.mxu0
        %1093 = vst.msk [vmem:[#allocation3 + $0xc8] sm:$0xff] %vm560, %v970
        %1094 = vst.msk [vmem:[#allocation3 + $0xd0] sm:$0xff] %vm560, %v975
        %1095 = vst.msk [vmem:[#allocation3 + $0xd8] sm:$0xff] %vm560, %v980
        %1096 = vst.msk [vmem:[#allocation3 + $0xe0] sm:$0xff] %vm560, %v985
        %1097 = vst.msk [vmem:[#allocation3 + $0xe8] sm:$0xff] %vm560, %v990
        %1098 = vst.msk [vmem:[#allocation3 + $0xf0] sm:$0xff] %vm560, %v995
        %1099 = vst.msk [vmem:[#allocation3 + $0xf8] sm:$0xff] %vm560, %v1000
        %1100 = vst.msk [vmem:[#allocation3 + $0x100] sm:$0xff] %vm560, %v1005
        %1101 = vst.msk [vmem:[#allocation3 + $0x108] sm:$0xff] %vm560, %v1010
        %1102 = vst.msk [vmem:[#allocation3 + $0x110] sm:$0xff] %vm560, %v1015
        %1103 = vst.msk [vmem:[#allocation3 + $0x118] sm:$0xff] %vm560, %v1020
        %1104 = vst.msk [vmem:[#allocation3 + $0x120] sm:$0xff] %vm560, %v1025
        %1105 = vst.msk [vmem:[#allocation3 + $0x128] sm:$0xff] %vm560, %v1030
        %1106 = vst.msk [vmem:[#allocation3 + $0x130] sm:$0xff] %vm560, %v1035
        %1107 = vst.msk [vmem:[#allocation3 + $0x138] sm:$0xff] %vm560, %v1040
        %1108 = vst.msk [vmem:[#allocation3 + $0x140] sm:$0xff] %vm560, %v1045
        %1109 = vst.msk [vmem:[#allocation3 + $0x148] sm:$0xff] %vm560, %v1050
        %1110 = vst.msk [vmem:[#allocation3 + $0x150] sm:$0xff] %vm560, %v1055
        %1111 = vst.msk [vmem:[#allocation3 + $0x158] sm:$0xff] %vm560, %v1060
        %1112 = vst.msk [vmem:[#allocation3 + $0x160] sm:$0xff] %vm560, %v1065
        %1113 = vst.msk [vmem:[#allocation3 + $0x168] sm:$0xff] %vm560, %v1070
        %1114 = vst.msk [vmem:[#allocation3 + $0x170] sm:$0xff] %vm560, %v1075
        %1115 = vst.msk [vmem:[#allocation3 + $0x178] sm:$0xff] %vm560, %v1080
        %1116 = vst.msk [vmem:[#allocation3 + $0x180] sm:$0xff] %vm560, %v1085
        %1117 = vst.msk [vmem:[#allocation3 + $0x188] sm:$0xff] %vm560, %v1090
        %v1118 = vld [vmem:[#allocation3] sm:$0xff]
        %v1119 = vld [vmem:[#allocation3 + $0x8] sm:$0xff]
        %v1120 = vld [vmem:[#allocation3 + $0x10] sm:$0xff]
        %v1121 = vld [vmem:[#allocation3 + $0x18] sm:$0xff]
        %v1122 = vld [vmem:[#allocation3 + $0x20] sm:$0xff]
        %v1123 = vld [vmem:[#allocation3 + $0x28] sm:$0xff]
        %v1124 = vld [vmem:[#allocation3 + $0x30] sm:$0xff]
        %v1125 = vld [vmem:[#allocation3 + $0x38] sm:$0xff]
        %v1126 = vld [vmem:[#allocation3 + $0x40] sm:$0xff]
        %v1127 = vld [vmem:[#allocation3 + $0x48] sm:$0xff]
        %v1128 = vld [vmem:[#allocation3 + $0x50] sm:$0xff]
        %v1129 = vld [vmem:[#allocation3 + $0x58] sm:$0xff]
        %v1130 = vld [vmem:[#allocation3 + $0x60] sm:$0xff]
        %v1131 = vld [vmem:[#allocation3 + $0x68] sm:$0xff]
        %v1132 = vld [vmem:[#allocation3 + $0x70] sm:$0xff]
        %v1133 = vld [vmem:[#allocation3 + $0x78] sm:$0xff]
        %v1134 = vld [vmem:[#allocation3 + $0x80] sm:$0xff]
        %v1135 = vld [vmem:[#allocation3 + $0x88] sm:$0xff]
        %v1136 = vld [vmem:[#allocation3 + $0x90] sm:$0xff]
        %v1137 = vld [vmem:[#allocation3 + $0x98] sm:$0xff]
        %v1138 = vld [vmem:[#allocation3 + $0xa0] sm:$0xff]
        %v1139 = vld [vmem:[#allocation3 + $0xa8] sm:$0xff]
        %v1140 = vld [vmem:[#allocation3 + $0xb0] sm:$0xff]
        %v1141 = vld [vmem:[#allocation3 + $0xb8] sm:$0xff]
        %v1142 = vld [vmem:[#allocation3 + $0xc0] sm:$0xff]
        %v1143 = vld [vmem:[#allocation3 + $0xc8] sm:$0xff]
        %v1144 = vld [vmem:[#allocation3 + $0xd0] sm:$0xff]
        %v1145 = vld [vmem:[#allocation3 + $0xd8] sm:$0xff]
        %v1146 = vld [vmem:[#allocation3 + $0xe0] sm:$0xff]
        %v1147 = vld [vmem:[#allocation3 + $0xe8] sm:$0xff]
        %v1148 = vld [vmem:[#allocation3 + $0xf0] sm:$0xff]
        %v1149 = vld [vmem:[#allocation3 + $0xf8] sm:$0xff]
        %v1150 = vld [vmem:[#allocation3 + $0x100] sm:$0xff]
        %v1151 = vld [vmem:[#allocation3 + $0x108] sm:$0xff]
        %v1152 = vld [vmem:[#allocation3 + $0x110] sm:$0xff]
        %v1153 = vld [vmem:[#allocation3 + $0x118] sm:$0xff]
        %v1154 = vld [vmem:[#allocation3 + $0x120] sm:$0xff]
        %v1155 = vld [vmem:[#allocation3 + $0x128] sm:$0xff]
        %v1156 = vld [vmem:[#allocation3 + $0x130] sm:$0xff]
        %v1157 = vld [vmem:[#allocation3 + $0x138] sm:$0xff]
        %v1158 = vld [vmem:[#allocation3 + $0x140] sm:$0xff]
        %v1159 = vld [vmem:[#allocation3 + $0x148] sm:$0xff]
        %v1160 = vld [vmem:[#allocation3 + $0x150] sm:$0xff]
        %v1161 = vld [vmem:[#allocation3 + $0x158] sm:$0xff]
        %v1162 = vld [vmem:[#allocation3 + $0x160] sm:$0xff]
        %v1163 = vld [vmem:[#allocation3 + $0x168] sm:$0xff]
        %v1164 = vld [vmem:[#allocation3 + $0x170] sm:$0xff]
        %v1165 = vld [vmem:[#allocation3 + $0x178] sm:$0xff]
        %v1166 = vld [vmem:[#allocation3 + $0x180] sm:$0xff]
        %v1167 = vld [vmem:[#allocation3 + $0x188] sm:$0xff]
        %v1168 = vld [vmem:[#allocation8] sm:$0xff]
        %v1169 = vld [vmem:[#allocation8 + $0x8] sm:$0xff]
        %v1170 = vld [vmem:[#allocation8 + $0x10] sm:$0xff]
        %v1171 = vld [vmem:[#allocation8 + $0x18] sm:$0xff]
        %v1173 = vsel %vm560, %v1118, 0
        %v1176 = vsel %vm560, %v1119, 0
        %v1179 = vsel %vm560, %v1120, 0
        %v1182 = vsel %vm560, %v1121, 0
        %v1185 = vsel %vm560, %v1122, 0
        %v1188 = vsel %vm560, %v1123, 0
        %v1191 = vsel %vm560, %v1124, 0
        %v1194 = vsel %vm560, %v1125, 0
        %v1197 = vsel %vm560, %v1126, 0
        %v1200 = vsel %vm560, %v1127, 0
        %v1203 = vsel %vm560, %v1128, 0
        %v1206 = vsel %vm560, %v1129, 0
        %v1209 = vsel %vm560, %v1130, 0
        %v1212 = vsel %vm560, %v1131, 0
        %v1215 = vsel %vm560, %v1132, 0
        %v1218 = vsel %vm560, %v1133, 0
        %v1221 = vsel %vm560, %v1134, 0
        %v1224 = vsel %vm560, %v1135, 0
        %v1227 = vsel %vm560, %v1136, 0
        %v1230 = vsel %vm560, %v1137, 0
        %v1233 = vsel %vm560, %v1138, 0
        %v1236 = vsel %vm560, %v1139, 0
        %v1239 = vsel %vm560, %v1140, 0
        %v1242 = vsel %vm560, %v1141, 0
        %v1245 = vsel %vm560, %v1142, 0
        %v1248 = vsel %vm560, %v1143, 0
        %v1251 = vsel %vm560, %v1144, 0
        %v1254 = vsel %vm560, %v1145, 0
        %v1257 = vsel %vm560, %v1146, 0
        %v1260 = vsel %vm560, %v1147, 0
        %v1263 = vsel %vm560, %v1148, 0
        %v1266 = vsel %vm560, %v1149, 0
        %v1269 = vsel %vm560, %v1150, 0
        %v1272 = vsel %vm560, %v1151, 0
        %v1275 = vsel %vm560, %v1152, 0
        %v1278 = vsel %vm560, %v1153, 0
        %v1281 = vsel %vm560, %v1154, 0
        %v1284 = vsel %vm560, %v1155, 0
        %v1287 = vsel %vm560, %v1156, 0
        %v1290 = vsel %vm560, %v1157, 0
        %v1293 = vsel %vm560, %v1158, 0
        %v1296 = vsel %vm560, %v1159, 0
        %v1299 = vsel %vm560, %v1160, 0
        %v1302 = vsel %vm560, %v1161, 0
        %v1305 = vsel %vm560, %v1162, 0
        %v1308 = vsel %vm560, %v1163, 0
        %v1311 = vsel %vm560, %v1164, 0
        %v1314 = vsel %vm560, %v1165, 0
        %v1317 = vsel %vm560, %v1166, 0
        %v1320 = vsel %vm560, %v1167, 0
        %1322 = vmatprep.subr.mxu0 0.0
        %1323 = vmatpush1.msra.mxu0 0.0
        %1324 = vmatprep.subr.mxu0 0.0
        %1325 = vmatpush1.msra.mxu0 0.0
        %1326 = vmatprep.subr.mxu0 0.0
        %1327 = vmatpush1.msra.mxu0 0.0
        %1328 = vmatprep.subr.mxu0 0.0
        %1329 = vmatpush1.msra.mxu0 0.0
        %1330 = vmatprep.subr.mxu0 0.0
        %1331 = vmatpush1.msra.mxu0 0.0
        %1332 = vmatprep.subr.mxu0 0.0
        %1333 = vmatpush1.msra.mxu0 0.0
        %1334 = vmatprep.subr.mxu0 0.0
        %1335 = vmatpush1.msra.mxu0 0.0
        %1336 = vmatprep.subr.mxu0 0.0
        %1337 = vmatpush1.msra.mxu0 0.0
        %1338 = vmatprep.subr.mxu0 0.0
        %1339 = vmatpush1.msra.mxu0 0.0
        %1340 = vmatprep.subr.mxu0 0.0
        %1341 = vmatpush1.msra.mxu0 0.0
        %1342 = vmatprep.subr.mxu0 0.0
        %1343 = vmatpush1.msra.mxu0 0.0
        %1344 = vmatprep.subr.mxu0 0.0
        %1345 = vmatpush1.msra.mxu0 0.0
        %1346 = vmatprep.subr.mxu0 0.0
        %1347 = vmatpush1.msra.mxu0 0.0
        %1348 = vmatprep.subr.mxu0 0.0
        %1349 = vmatpush1.msra.mxu0 0.0
        %1350 = vmatprep.subr.mxu0 %v1171
        %1351 = vmatpush1.msra.mxu0 %v1170
        %1352 = vmatprep.subr.mxu0 %v1169
        %1353 = vmatpush1.msra.mxu0 %v1168
        %1354 = vmatprep.subr.mxu0 0.0
        %1355 = vmatpush2.msra.mxu0 0.0
        %1356 = vmatprep.subr.mxu0 0.0
        %1357 = vmatpush2.msra.mxu0 0.0
        %1358 = vmatprep.subr.mxu0 0.0
        %1359 = vmatpush2.msra.mxu0 0.0
        %1360 = vmatprep.subr.mxu0 0.0
        %1361 = vmatpush2.msra.mxu0 0.0
        %1362 = vmatprep.subr.mxu0 0.0
        %1363 = vmatpush2.msra.mxu0 0.0
        %1364 = vmatprep.subr.mxu0 0.0
        %1365 = vmatpush2.msra.mxu0 0.0
        %1366 = vmatprep.subr.mxu0 0.0
        %1367 = vmatpush2.msra.mxu0 0.0
        %1368 = vmatprep.subr.mxu0 0.0
        %1369 = vmatpush2.msra.mxu0 0.0
        %1370 = vmatprep.subr.mxu0 0.0
        %1371 = vmatpush2.msra.mxu0 0.0
        %1372 = vmatprep.subr.mxu0 0.0
        %1373 = vmatpush2.msra.mxu0 0.0
        %1374 = vmatprep.subr.mxu0 0.0
        %1375 = vmatpush2.msra.mxu0 0.0
        %1376 = vmatprep.subr.mxu0 0.0
        %1377 = vmatpush2.msra.mxu0 0.0
        %1378 = vmatprep.subr.mxu0 0.0
        %1379 = vmatpush2.msra.mxu0 0.0
        %1380 = vmatprep.subr.mxu0 0.0
        %1381 = vmatpush2.msra.mxu0 0.0
        %1382 = vmatprep.subr.mxu0 0.0
        %1383 = vmatpush2.msra.mxu0 0.0
        %1384 = vmatprep.subr.mxu0 0.0
        %1385 = vmatpush2.msra.mxu0 0.0
        %1386 = vmatprep.mubr.f32.mxu0 0.0
        %1387 = vmatmul.mubr.f32.gmra.mxu0 %v1173
        %v1388 = vpop.f32.mrf.mxu0
        %v1389 = vadd.f32 0.0, %v1388
        %v1390 = vpop.f32.mrf.mxu0
        %v1391 = vadd.f32 0.0, %v1390
        %1392 = vmatprep.mubr.f32.mxu0 0.0
        %1393 = vmatmul.mubr.f32.gmra.mxu0 %v1176
        %v1394 = vpop.f32.mrf.mxu0
        %v1395 = vadd.f32 0.0, %v1394
        %v1396 = vpop.f32.mrf.mxu0
        %v1397 = vadd.f32 0.0, %v1396
        %1398 = vmatprep.mubr.f32.mxu0 0.0
        %1399 = vmatmul.mubr.f32.gmra.mxu0 %v1179
        %v1400 = vpop.f32.mrf.mxu0
        %v1401 = vadd.f32 0.0, %v1400
        %v1402 = vpop.f32.mrf.mxu0
        %v1403 = vadd.f32 0.0, %v1402
        %1404 = vmatprep.mubr.f32.mxu0 0.0
        %1405 = vmatmul.mubr.f32.gmra.mxu0 %v1182
        %v1406 = vpop.f32.mrf.mxu0
        %v1407 = vadd.f32 0.0, %v1406
        %v1408 = vpop.f32.mrf.mxu0
        %v1409 = vadd.f32 0.0, %v1408
        %1410 = vmatprep.mubr.f32.mxu0 0.0
        %1411 = vmatmul.mubr.f32.gmra.mxu0 %v1185
        %v1412 = vpop.f32.mrf.mxu0
        %v1413 = vadd.f32 0.0, %v1412
        %v1414 = vpop.f32.mrf.mxu0
        %v1415 = vadd.f32 0.0, %v1414
        %1416 = vmatprep.mubr.f32.mxu0 0.0
        %1417 = vmatmul.mubr.f32.gmra.mxu0 %v1188
        %v1418 = vpop.f32.mrf.mxu0
        %v1419 = vadd.f32 0.0, %v1418
        %v1420 = vpop.f32.mrf.mxu0
        %v1421 = vadd.f32 0.0, %v1420
        %1422 = vmatprep.mubr.f32.mxu0 0.0
        %1423 = vmatmul.mubr.f32.gmra.mxu0 %v1191
        %v1424 = vpop.f32.mrf.mxu0
        %v1425 = vadd.f32 0.0, %v1424
        %v1426 = vpop.f32.mrf.mxu0
        %v1427 = vadd.f32 0.0, %v1426
        %1428 = vmatprep.mubr.f32.mxu0 0.0
        %1429 = vmatmul.mubr.f32.gmra.mxu0 %v1194
        %v1430 = vpop.f32.mrf.mxu0
        %v1431 = vadd.f32 0.0, %v1430
        %v1432 = vpop.f32.mrf.mxu0
        %v1433 = vadd.f32 0.0, %v1432
        %1434 = vmatprep.mubr.f32.mxu0 0.0
        %1435 = vmatmul.mubr.f32.gmra.mxu0 %v1197
        %v1436 = vpop.f32.mrf.mxu0
        %v1437 = vadd.f32 0.0, %v1436
        %v1438 = vpop.f32.mrf.mxu0
        %v1439 = vadd.f32 0.0, %v1438
        %1440 = vmatprep.mubr.f32.mxu0 0.0
        %1441 = vmatmul.mubr.f32.gmra.mxu0 %v1200
        %v1442 = vpop.f32.mrf.mxu0
        %v1443 = vadd.f32 0.0, %v1442
        %v1444 = vpop.f32.mrf.mxu0
        %v1445 = vadd.f32 0.0, %v1444
        %1446 = vmatprep.mubr.f32.mxu0 0.0
        %1447 = vmatmul.mubr.f32.gmra.mxu0 %v1203
        %v1448 = vpop.f32.mrf.mxu0
        %v1449 = vadd.f32 0.0, %v1448
        %v1450 = vpop.f32.mrf.mxu0
        %v1451 = vadd.f32 0.0, %v1450
        %1452 = vmatprep.mubr.f32.mxu0 0.0
        %1453 = vmatmul.mubr.f32.gmra.mxu0 %v1206
        %v1454 = vpop.f32.mrf.mxu0
        %v1455 = vadd.f32 0.0, %v1454
        %v1456 = vpop.f32.mrf.mxu0
        %v1457 = vadd.f32 0.0, %v1456
        %1458 = vmatprep.mubr.f32.mxu0 0.0
        %1459 = vmatmul.mubr.f32.gmra.mxu0 %v1209
        %v1460 = vpop.f32.mrf.mxu0
        %v1461 = vadd.f32 0.0, %v1460
        %v1462 = vpop.f32.mrf.mxu0
        %v1463 = vadd.f32 0.0, %v1462
        %1464 = vmatprep.mubr.f32.mxu0 0.0
        %1465 = vmatmul.mubr.f32.gmra.mxu0 %v1212
        %v1466 = vpop.f32.mrf.mxu0
        %v1467 = vadd.f32 0.0, %v1466
        %v1468 = vpop.f32.mrf.mxu0
        %v1469 = vadd.f32 0.0, %v1468
        %1470 = vmatprep.mubr.f32.mxu0 0.0
        %1471 = vmatmul.mubr.f32.gmra.mxu0 %v1215
        %v1472 = vpop.f32.mrf.mxu0
        %v1473 = vadd.f32 0.0, %v1472
        %v1474 = vpop.f32.mrf.mxu0
        %v1475 = vadd.f32 0.0, %v1474
        %1476 = vmatprep.mubr.f32.mxu0 0.0
        %1477 = vmatmul.mubr.f32.gmra.mxu0 %v1218
        %v1478 = vpop.f32.mrf.mxu0
        %v1479 = vadd.f32 0.0, %v1478
        %v1480 = vpop.f32.mrf.mxu0
        %v1481 = vadd.f32 0.0, %v1480
        %1482 = vmatprep.mubr.f32.mxu0 0.0
        %1483 = vmatmul.mubr.f32.gmra.mxu0 %v1221
        %v1484 = vpop.f32.mrf.mxu0
        %v1485 = vadd.f32 0.0, %v1484
        %v1486 = vpop.f32.mrf.mxu0
        %v1487 = vadd.f32 0.0, %v1486
        %1488 = vmatprep.mubr.f32.mxu0 0.0
        %1489 = vmatmul.mubr.f32.gmra.mxu0 %v1224
        %v1490 = vpop.f32.mrf.mxu0
        %v1491 = vadd.f32 0.0, %v1490
        %v1492 = vpop.f32.mrf.mxu0
        %v1493 = vadd.f32 0.0, %v1492
        %1494 = vmatprep.mubr.f32.mxu0 0.0
        %1495 = vmatmul.mubr.f32.gmra.mxu0 %v1227
        %v1496 = vpop.f32.mrf.mxu0
        %v1497 = vadd.f32 0.0, %v1496
        %v1498 = vpop.f32.mrf.mxu0
        %v1499 = vadd.f32 0.0, %v1498
        %1500 = vmatprep.mubr.f32.mxu0 0.0
        %1501 = vmatmul.mubr.f32.gmra.mxu0 %v1230
        %v1502 = vpop.f32.mrf.mxu0
        %v1503 = vadd.f32 0.0, %v1502
        %v1504 = vpop.f32.mrf.mxu0
        %v1505 = vadd.f32 0.0, %v1504
        %1506 = vmatprep.mubr.f32.mxu0 0.0
        %1507 = vmatmul.mubr.f32.gmra.mxu0 %v1233
        %v1508 = vpop.f32.mrf.mxu0
        %v1509 = vadd.f32 0.0, %v1508
        %v1510 = vpop.f32.mrf.mxu0
        %v1511 = vadd.f32 0.0, %v1510
        %1512 = vmatprep.mubr.f32.mxu0 0.0
        %1513 = vmatmul.mubr.f32.gmra.mxu0 %v1236
        %v1514 = vpop.f32.mrf.mxu0
        %v1515 = vadd.f32 0.0, %v1514
        %v1516 = vpop.f32.mrf.mxu0
        %v1517 = vadd.f32 0.0, %v1516
        %1518 = vmatprep.mubr.f32.mxu0 0.0
        %1519 = vmatmul.mubr.f32.gmra.mxu0 %v1239
        %v1520 = vpop.f32.mrf.mxu0
        %v1521 = vadd.f32 0.0, %v1520
        %v1522 = vpop.f32.mrf.mxu0
        %v1523 = vadd.f32 0.0, %v1522
        %1524 = vmatprep.mubr.f32.mxu0 0.0
        %1525 = vmatmul.mubr.f32.gmra.mxu0 %v1242
        %v1526 = vpop.f32.mrf.mxu0
        %v1527 = vadd.f32 0.0, %v1526
        %v1528 = vpop.f32.mrf.mxu0
        %v1529 = vadd.f32 0.0, %v1528
        %1530 = vmatprep.mubr.f32.mxu0 0.0
        %1531 = vmatmul.mubr.f32.gmra.mxu0 %v1245
        %v1532 = vpop.f32.mrf.mxu0
        %v1533 = vadd.f32 0.0, %v1532
        %v1534 = vpop.f32.mrf.mxu0
        %v1535 = vadd.f32 0.0, %v1534
        %1536 = vmatprep.mubr.f32.mxu0 0.0
        %1537 = vmatmul.mubr.f32.gmra.mxu0 %v1248
        %v1538 = vpop.f32.mrf.mxu0
        %v1539 = vadd.f32 0.0, %v1538
        %v1540 = vpop.f32.mrf.mxu0
        %v1541 = vadd.f32 0.0, %v1540
        %1542 = vmatprep.mubr.f32.mxu0 0.0
        %1543 = vmatmul.mubr.f32.gmra.mxu0 %v1251
        %v1544 = vpop.f32.mrf.mxu0
        %v1545 = vadd.f32 0.0, %v1544
        %v1546 = vpop.f32.mrf.mxu0
        %v1547 = vadd.f32 0.0, %v1546
        %1548 = vmatprep.mubr.f32.mxu0 0.0
        %1549 = vmatmul.mubr.f32.gmra.mxu0 %v1254
        %v1550 = vpop.f32.mrf.mxu0
        %v1551 = vadd.f32 0.0, %v1550
        %v1552 = vpop.f32.mrf.mxu0
        %v1553 = vadd.f32 0.0, %v1552
        %1554 = vmatprep.mubr.f32.mxu0 0.0
        %1555 = vmatmul.mubr.f32.gmra.mxu0 %v1257
        %v1556 = vpop.f32.mrf.mxu0
        %v1557 = vadd.f32 0.0, %v1556
        %v1558 = vpop.f32.mrf.mxu0
        %v1559 = vadd.f32 0.0, %v1558
        %1560 = vmatprep.mubr.f32.mxu0 0.0
        %1561 = vmatmul.mubr.f32.gmra.mxu0 %v1260
        %v1562 = vpop.f32.mrf.mxu0
        %v1563 = vadd.f32 0.0, %v1562
        %v1564 = vpop.f32.mrf.mxu0
        %v1565 = vadd.f32 0.0, %v1564
        %1566 = vmatprep.mubr.f32.mxu0 0.0
        %1567 = vmatmul.mubr.f32.gmra.mxu0 %v1263
        %v1568 = vpop.f32.mrf.mxu0
        %v1569 = vadd.f32 0.0, %v1568
        %v1570 = vpop.f32.mrf.mxu0
        %v1571 = vadd.f32 0.0, %v1570
        %1572 = vmatprep.mubr.f32.mxu0 0.0
        %1573 = vmatmul.mubr.f32.gmra.mxu0 %v1266
        %v1574 = vpop.f32.mrf.mxu0
        %v1575 = vadd.f32 0.0, %v1574
        %v1576 = vpop.f32.mrf.mxu0
        %v1577 = vadd.f32 0.0, %v1576
        %1578 = vmatprep.mubr.f32.mxu0 0.0
        %1579 = vmatmul.mubr.f32.gmra.mxu0 %v1269
        %v1580 = vpop.f32.mrf.mxu0
        %v1581 = vadd.f32 0.0, %v1580
        %v1582 = vpop.f32.mrf.mxu0
        %v1583 = vadd.f32 0.0, %v1582
        %1584 = vmatprep.mubr.f32.mxu0 0.0
        %1585 = vmatmul.mubr.f32.gmra.mxu0 %v1272
        %v1586 = vpop.f32.mrf.mxu0
        %v1587 = vadd.f32 0.0, %v1586
        %v1588 = vpop.f32.mrf.mxu0
        %v1589 = vadd.f32 0.0, %v1588
        %1590 = vmatprep.mubr.f32.mxu0 0.0
        %1591 = vmatmul.mubr.f32.gmra.mxu0 %v1275
        %v1592 = vpop.f32.mrf.mxu0
        %v1593 = vadd.f32 0.0, %v1592
        %v1594 = vpop.f32.mrf.mxu0
        %v1595 = vadd.f32 0.0, %v1594
        %1596 = vmatprep.mubr.f32.mxu0 0.0
        %1597 = vmatmul.mubr.f32.gmra.mxu0 %v1278
        %v1598 = vpop.f32.mrf.mxu0
        %v1599 = vadd.f32 0.0, %v1598
        %v1600 = vpop.f32.mrf.mxu0
        %v1601 = vadd.f32 0.0, %v1600
        %1602 = vmatprep.mubr.f32.mxu0 0.0
        %1603 = vmatmul.mubr.f32.gmra.mxu0 %v1281
        %v1604 = vpop.f32.mrf.mxu0
        %v1605 = vadd.f32 0.0, %v1604
        %v1606 = vpop.f32.mrf.mxu0
        %v1607 = vadd.f32 0.0, %v1606
        %1608 = vmatprep.mubr.f32.mxu0 0.0
        %1609 = vmatmul.mubr.f32.gmra.mxu0 %v1284
        %v1610 = vpop.f32.mrf.mxu0
        %v1611 = vadd.f32 0.0, %v1610
        %v1612 = vpop.f32.mrf.mxu0
        %v1613 = vadd.f32 0.0, %v1612
        %1614 = vmatprep.mubr.f32.mxu0 0.0
        %1615 = vmatmul.mubr.f32.gmra.mxu0 %v1287
        %v1616 = vpop.f32.mrf.mxu0
        %v1617 = vadd.f32 0.0, %v1616
        %v1618 = vpop.f32.mrf.mxu0
        %v1619 = vadd.f32 0.0, %v1618
        %1620 = vmatprep.mubr.f32.mxu0 0.0
        %1621 = vmatmul.mubr.f32.gmra.mxu0 %v1290
        %v1622 = vpop.f32.mrf.mxu0
        %v1623 = vadd.f32 0.0, %v1622
        %v1624 = vpop.f32.mrf.mxu0
        %v1625 = vadd.f32 0.0, %v1624
        %1626 = vmatprep.mubr.f32.mxu0 0.0
        %1627 = vmatmul.mubr.f32.gmra.mxu0 %v1293
        %v1628 = vpop.f32.mrf.mxu0
        %v1629 = vadd.f32 0.0, %v1628
        %v1630 = vpop.f32.mrf.mxu0
        %v1631 = vadd.f32 0.0, %v1630
        %1632 = vmatprep.mubr.f32.mxu0 0.0
        %1633 = vmatmul.mubr.f32.gmra.mxu0 %v1296
        %v1634 = vpop.f32.mrf.mxu0
        %v1635 = vadd.f32 0.0, %v1634
        %v1636 = vpop.f32.mrf.mxu0
        %v1637 = vadd.f32 0.0, %v1636
        %1638 = vmatprep.mubr.f32.mxu0 0.0
        %1639 = vmatmul.mubr.f32.gmra.mxu0 %v1299
        %v1640 = vpop.f32.mrf.mxu0
        %v1641 = vadd.f32 0.0, %v1640
        %v1642 = vpop.f32.mrf.mxu0
        %v1643 = vadd.f32 0.0, %v1642
        %1644 = vmatprep.mubr.f32.mxu0 0.0
        %1645 = vmatmul.mubr.f32.gmra.mxu0 %v1302
        %v1646 = vpop.f32.mrf.mxu0
        %v1647 = vadd.f32 0.0, %v1646
        %v1648 = vpop.f32.mrf.mxu0
        %v1649 = vadd.f32 0.0, %v1648
        %1650 = vmatprep.mubr.f32.mxu0 0.0
        %1651 = vmatmul.mubr.f32.gmra.mxu0 %v1305
        %v1652 = vpop.f32.mrf.mxu0
        %v1653 = vadd.f32 0.0, %v1652
        %v1654 = vpop.f32.mrf.mxu0
        %v1655 = vadd.f32 0.0, %v1654
        %1656 = vmatprep.mubr.f32.mxu0 0.0
        %1657 = vmatmul.mubr.f32.gmra.mxu0 %v1308
        %v1658 = vpop.f32.mrf.mxu0
        %v1659 = vadd.f32 0.0, %v1658
        %v1660 = vpop.f32.mrf.mxu0
        %v1661 = vadd.f32 0.0, %v1660
        %1662 = vmatprep.mubr.f32.mxu0 0.0
        %1663 = vmatmul.mubr.f32.gmra.mxu0 %v1311
        %v1664 = vpop.f32.mrf.mxu0
        %v1665 = vadd.f32 0.0, %v1664
        %v1666 = vpop.f32.mrf.mxu0
        %v1667 = vadd.f32 0.0, %v1666
        %1668 = vmatprep.mubr.f32.mxu0 0.0
        %1669 = vmatmul.mubr.f32.gmra.mxu0 %v1314
        %v1670 = vpop.f32.mrf.mxu0
        %v1671 = vadd.f32 0.0, %v1670
        %v1672 = vpop.f32.mrf.mxu0
        %v1673 = vadd.f32 0.0, %v1672
        %1674 = vmatprep.mubr.f32.mxu0 0.0
        %1675 = vmatmul.mubr.f32.gmra.mxu0 %v1317
        %v1676 = vpop.f32.mrf.mxu0
        %v1677 = vadd.f32 0.0, %v1676
        %v1678 = vpop.f32.mrf.mxu0
        %v1679 = vadd.f32 0.0, %v1678
        %1680 = vmatprep.mubr.f32.mxu0 0.0
        %1681 = vmatmul.mubr.f32.gmra.mxu0 %v1320
        %v1682 = vpop.f32.mrf.mxu0
        %v1683 = vadd.f32 0.0, %v1682
        %v1684 = vpop.f32.mrf.mxu0
        %v1685 = vadd.f32 0.0, %v1684
        %1686 = vdwg.mxu0
        %v1687 = vld [vmem:[#allocation10] sm:$0xff]
        %v1688 = vld [vmem:[#allocation10 + $0x8] sm:$0xff]
        %v1689 = vld [vmem:[#allocation10 + $0x10] sm:$0xff]
        %v1690 = vld [vmem:[#allocation10 + $0x18] sm:$0xff]
        %v1691 = vld [vmem:[#allocation10 + $0x20] sm:$0xff]
        %v1692 = vld [vmem:[#allocation10 + $0x28] sm:$0xff]
        %v1693 = vld [vmem:[#allocation10 + $0x30] sm:$0xff]
        %v1694 = vld [vmem:[#allocation10 + $0x38] sm:$0xff]
        %v1695 = vld [vmem:[#allocation10 + $0x40] sm:$0xff]
        %v1696 = vld [vmem:[#allocation10 + $0x48] sm:$0xff]
        %v1697 = vld [vmem:[#allocation10 + $0x50] sm:$0xff]
        %v1698 = vld [vmem:[#allocation10 + $0x58] sm:$0xff]
        %v1699 = vld [vmem:[#allocation10 + $0x60] sm:$0xff]
        %v1700 = vld [vmem:[#allocation10 + $0x68] sm:$0xff]
        %v1701 = vld [vmem:[#allocation10 + $0x70] sm:$0xff]
        %v1702 = vld [vmem:[#allocation10 + $0x78] sm:$0xff]
        %v1703 = vld [vmem:[#allocation10 + $0x80] sm:$0xff]
        %v1704 = vld [vmem:[#allocation10 + $0x88] sm:$0xff]
        %v1705 = vld [vmem:[#allocation10 + $0x90] sm:$0xff]
        %v1706 = vld [vmem:[#allocation10 + $0x98] sm:$0xff]
        %v1707 = vld [vmem:[#allocation10 + $0xa0] sm:$0xff]
        %v1708 = vld [vmem:[#allocation10 + $0xa8] sm:$0xff]
        %v1709 = vld [vmem:[#allocation10 + $0xb0] sm:$0xff]
        %v1710 = vld [vmem:[#allocation10 + $0xb8] sm:$0xff]
        %v1711 = vld [vmem:[#allocation10 + $0xc0] sm:$0xff]
        %v1712 = vld [vmem:[#allocation10 + $0xc8] sm:$0xff]
        %v1713 = vld [vmem:[#allocation10 + $0xd0] sm:$0xff]
        %v1714 = vld [vmem:[#allocation10 + $0xd8] sm:$0xff]
        %v1715 = vld [vmem:[#allocation10 + $0xe0] sm:$0xff]
        %v1716 = vld [vmem:[#allocation10 + $0xe8] sm:$0xff]
        %v1717 = vld [vmem:[#allocation10 + $0xf0] sm:$0xff]
        %v1718 = vld [vmem:[#allocation10 + $0xf8] sm:$0xff]
        %v1719 = vld [vmem:[#allocation10 + $0x100] sm:$0xff]
        %v1720 = vld [vmem:[#allocation10 + $0x108] sm:$0xff]
        %v1721 = vld [vmem:[#allocation10 + $0x110] sm:$0xff]
        %v1722 = vld [vmem:[#allocation10 + $0x118] sm:$0xff]
        %v1723 = vld [vmem:[#allocation10 + $0x120] sm:$0xff]
        %v1724 = vld [vmem:[#allocation10 + $0x128] sm:$0xff]
        %v1725 = vld [vmem:[#allocation10 + $0x130] sm:$0xff]
        %v1726 = vld [vmem:[#allocation10 + $0x138] sm:$0xff]
        %v1727 = vld [vmem:[#allocation10 + $0x140] sm:$0xff]
        %v1728 = vld [vmem:[#allocation10 + $0x148] sm:$0xff]
        %v1729 = vld [vmem:[#allocation10 + $0x150] sm:$0xff]
        %v1730 = vld [vmem:[#allocation10 + $0x158] sm:$0xff]
        %v1731 = vld [vmem:[#allocation10 + $0x160] sm:$0xff]
        %v1732 = vld [vmem:[#allocation10 + $0x168] sm:$0xff]
        %v1733 = vld [vmem:[#allocation10 + $0x170] sm:$0xff]
        %v1734 = vld [vmem:[#allocation10 + $0x178] sm:$0xff]
        %v1735 = vld [vmem:[#allocation10 + $0x180] sm:$0xff]
        %v1736 = vld [vmem:[#allocation10 + $0x188] sm:$0xff]
        %v1737 = vadd.f32 %v1389, %v1687
        %v1738 = vadd.f32 %v1391, %v1688
        %v1739 = vadd.f32 %v1395, %v1689
        %v1740 = vadd.f32 %v1397, %v1690
        %v1741 = vadd.f32 %v1401, %v1691
        %v1742 = vadd.f32 %v1403, %v1692
        %v1743 = vadd.f32 %v1407, %v1693
        %v1744 = vadd.f32 %v1409, %v1694
        %v1745 = vadd.f32 %v1413, %v1695
        %v1746 = vadd.f32 %v1415, %v1696
        %v1747 = vadd.f32 %v1419, %v1697
        %v1748 = vadd.f32 %v1421, %v1698
        %v1749 = vadd.f32 %v1425, %v1699
        %v1750 = vadd.f32 %v1427, %v1700
        %v1751 = vadd.f32 %v1431, %v1701
        %v1752 = vadd.f32 %v1433, %v1702
        %v1753 = vadd.f32 %v1437, %v1703
        %v1754 = vadd.f32 %v1439, %v1704
        %v1755 = vadd.f32 %v1443, %v1705
        %v1756 = vadd.f32 %v1445, %v1706
        %v1757 = vadd.f32 %v1449, %v1707
        %v1758 = vadd.f32 %v1451, %v1708
        %v1759 = vadd.f32 %v1455, %v1709
        %v1760 = vadd.f32 %v1457, %v1710
        %v1761 = vadd.f32 %v1461, %v1711
        %v1762 = vadd.f32 %v1463, %v1712
        %v1763 = vadd.f32 %v1467, %v1713
        %v1764 = vadd.f32 %v1469, %v1714
        %v1765 = vadd.f32 %v1473, %v1715
        %v1766 = vadd.f32 %v1475, %v1716
        %v1767 = vadd.f32 %v1479, %v1717
        %v1768 = vadd.f32 %v1481, %v1718
        %v1769 = vadd.f32 %v1485, %v1719
        %v1770 = vadd.f32 %v1487, %v1720
        %v1771 = vadd.f32 %v1491, %v1721
        %v1772 = vadd.f32 %v1493, %v1722
        %v1773 = vadd.f32 %v1497, %v1723
        %v1774 = vadd.f32 %v1499, %v1724
        %v1775 = vadd.f32 %v1503, %v1725
        %v1776 = vadd.f32 %v1505, %v1726
        %v1777 = vadd.f32 %v1509, %v1727
        %v1778 = vadd.f32 %v1511, %v1728
        %v1779 = vadd.f32 %v1515, %v1729
        %v1780 = vadd.f32 %v1517, %v1730
        %v1781 = vadd.f32 %v1521, %v1731
        %v1782 = vadd.f32 %v1523, %v1732
        %v1783 = vadd.f32 %v1527, %v1733
        %v1784 = vadd.f32 %v1529, %v1734
        %v1785 = vadd.f32 %v1533, %v1735
        %v1786 = vadd.f32 %v1535, %v1736
        %v1787 = vadd.f32 %v1539, %v1687
        %v1788 = vadd.f32 %v1541, %v1688
        %v1789 = vadd.f32 %v1545, %v1689
        %v1790 = vadd.f32 %v1547, %v1690
        %v1791 = vadd.f32 %v1551, %v1691
        %v1792 = vadd.f32 %v1553, %v1692
        %v1793 = vadd.f32 %v1557, %v1693
        %v1794 = vadd.f32 %v1559, %v1694
        %v1795 = vadd.f32 %v1563, %v1695
        %v1796 = vadd.f32 %v1565, %v1696
        %v1797 = vadd.f32 %v1569, %v1697
        %v1798 = vadd.f32 %v1571, %v1698
        %v1799 = vadd.f32 %v1575, %v1699
        %v1800 = vadd.f32 %v1577, %v1700
        %v1801 = vadd.f32 %v1581, %v1701
        %v1802 = vadd.f32 %v1583, %v1702
        %v1803 = vadd.f32 %v1587, %v1703
        %v1804 = vadd.f32 %v1589, %v1704
        %v1805 = vadd.f32 %v1593, %v1705
        %v1806 = vadd.f32 %v1595, %v1706
        %v1807 = vadd.f32 %v1599, %v1707
        %v1808 = vadd.f32 %v1601, %v1708
        %v1809 = vadd.f32 %v1605, %v1709
        %v1810 = vadd.f32 %v1607, %v1710
        %v1811 = vadd.f32 %v1611, %v1711
        %v1812 = vadd.f32 %v1613, %v1712
        %v1813 = vadd.f32 %v1617, %v1713
        %v1814 = vadd.f32 %v1619, %v1714
        %v1815 = vadd.f32 %v1623, %v1715
        %v1816 = vadd.f32 %v1625, %v1716
        %v1817 = vadd.f32 %v1629, %v1717
        %v1818 = vadd.f32 %v1631, %v1718
        %v1819 = vadd.f32 %v1635, %v1719
        %v1820 = vadd.f32 %v1637, %v1720
        %v1821 = vadd.f32 %v1641, %v1721
        %v1822 = vadd.f32 %v1643, %v1722
        %v1823 = vadd.f32 %v1647, %v1723
        %v1824 = vadd.f32 %v1649, %v1724
        %v1825 = vadd.f32 %v1653, %v1725
        %v1826 = vadd.f32 %v1655, %v1726
        %v1827 = vadd.f32 %v1659, %v1727
        %v1828 = vadd.f32 %v1661, %v1728
        %v1829 = vadd.f32 %v1665, %v1729
        %v1830 = vadd.f32 %v1667, %v1730
        %v1831 = vadd.f32 %v1671, %v1731
        %v1832 = vadd.f32 %v1673, %v1732
        %v1833 = vadd.f32 %v1677, %v1733
        %v1834 = vadd.f32 %v1679, %v1734
        %v1835 = vadd.f32 %v1683, %v1735
        %v1836 = vadd.f32 %v1685, %v1736
        %1837 = vst [vmem:[%s309] sm:$0xff] %v1737
        %vm1838 = vcmask 588800
        %1839 = vst.msk [vmem:[%s309 + $0x8] sm:$0xff] %vm1838, %v1738
        %1840 = vst [vmem:[%s309 + $0x10] sm:$0xff] %v1739
        %1841 = vst.msk [vmem:[%s309 + $0x18] sm:$0xff] %vm1838, %v1740
        %1842 = vst [vmem:[%s309 + $0x20] sm:$0xff] %v1741
        %1843 = vst.msk [vmem:[%s309 + $0x28] sm:$0xff] %vm1838, %v1742
        %1844 = vst [vmem:[%s309 + $0x30] sm:$0xff] %v1743
        %1845 = vst.msk [vmem:[%s309 + $0x38] sm:$0xff] %vm1838, %v1744
        %1846 = vst [vmem:[%s309 + $0x40] sm:$0xff] %v1745
        %1847 = vst.msk [vmem:[%s309 + $0x48] sm:$0xff] %vm1838, %v1746
        %1848 = vst [vmem:[%s309 + $0x50] sm:$0xff] %v1747
        %1849 = vst.msk [vmem:[%s309 + $0x58] sm:$0xff] %vm1838, %v1748
        %1850 = vst [vmem:[%s309 + $0x60] sm:$0xff] %v1749
        %1851 = vst.msk [vmem:[%s309 + $0x68] sm:$0xff] %vm1838, %v1750
        %1852 = vst [vmem:[%s309 + $0x70] sm:$0xff] %v1751
        %1853 = vst.msk [vmem:[%s309 + $0x78] sm:$0xff] %vm1838, %v1752
        %1854 = vst [vmem:[%s309 + $0x80] sm:$0xff] %v1753
        %1855 = vst.msk [vmem:[%s309 + $0x88] sm:$0xff] %vm1838, %v1754
        %1856 = vst [vmem:[%s309 + $0x90] sm:$0xff] %v1755
        %1857 = vst.msk [vmem:[%s309 + $0x98] sm:$0xff] %vm1838, %v1756
        %1858 = vst [vmem:[%s309 + $0xa0] sm:$0xff] %v1757
        %1859 = vst.msk [vmem:[%s309 + $0xa8] sm:$0xff] %vm1838, %v1758
        %1860 = vst [vmem:[%s309 + $0xb0] sm:$0xff] %v1759
        %1861 = vst.msk [vmem:[%s309 + $0xb8] sm:$0xff] %vm1838, %v1760
        %1862 = vst [vmem:[%s309 + $0xc0] sm:$0xff] %v1761
        %1863 = vst.msk [vmem:[%s309 + $0xc8] sm:$0xff] %vm1838, %v1762
        %1864 = vst [vmem:[%s309 + $0xd0] sm:$0xff] %v1763
        %1865 = vst.msk [vmem:[%s309 + $0xd8] sm:$0xff] %vm1838, %v1764
        %1866 = vst [vmem:[%s309 + $0xe0] sm:$0xff] %v1765
        %1867 = vst.msk [vmem:[%s309 + $0xe8] sm:$0xff] %vm1838, %v1766
        %1868 = vst [vmem:[%s309 + $0xf0] sm:$0xff] %v1767
        %1869 = vst.msk [vmem:[%s309 + $0xf8] sm:$0xff] %vm1838, %v1768
        %1870 = vst [vmem:[%s309 + $0x100] sm:$0xff] %v1769
        %1871 = vst.msk [vmem:[%s309 + $0x108] sm:$0xff] %vm1838, %v1770
        %1872 = vst [vmem:[%s309 + $0x110] sm:$0xff] %v1771
        %1873 = vst.msk [vmem:[%s309 + $0x118] sm:$0xff] %vm1838, %v1772
        %1874 = vst [vmem:[%s309 + $0x120] sm:$0xff] %v1773
        %1875 = vst.msk [vmem:[%s309 + $0x128] sm:$0xff] %vm1838, %v1774
        %1876 = vst [vmem:[%s309 + $0x130] sm:$0xff] %v1775
        %1877 = vst.msk [vmem:[%s309 + $0x138] sm:$0xff] %vm1838, %v1776
        %1878 = vst [vmem:[%s309 + $0x140] sm:$0xff] %v1777
        %1879 = vst.msk [vmem:[%s309 + $0x148] sm:$0xff] %vm1838, %v1778
        %1880 = vst [vmem:[%s309 + $0x150] sm:$0xff] %v1779
        %1881 = vst.msk [vmem:[%s309 + $0x158] sm:$0xff] %vm1838, %v1780
        %1882 = vst [vmem:[%s309 + $0x160] sm:$0xff] %v1781
        %1883 = vst.msk [vmem:[%s309 + $0x168] sm:$0xff] %vm1838, %v1782
        %1884 = vst [vmem:[%s309 + $0x170] sm:$0xff] %v1783
        %1885 = vst.msk [vmem:[%s309 + $0x178] sm:$0xff] %vm1838, %v1784
        %1886 = vst [vmem:[%s309 + $0x180] sm:$0xff] %v1785
        %1887 = vst.msk [vmem:[%s309 + $0x188] sm:$0xff] %vm1838, %v1786
        %1888 = vst [vmem:[%s309 + $0x190] sm:$0xff] %v1787
        %1889 = vst.msk [vmem:[%s309 + $0x198] sm:$0xff] %vm1838, %v1788
        %1890 = vst [vmem:[%s309 + $0x1a0] sm:$0xff] %v1789
        %1891 = vst.msk [vmem:[%s309 + $0x1a8] sm:$0xff] %vm1838, %v1790
        %1892 = vst [vmem:[%s309 + $0x1b0] sm:$0xff] %v1791
        %1893 = vst.msk [vmem:[%s309 + $0x1b8] sm:$0xff] %vm1838, %v1792
        %1894 = vst [vmem:[%s309 + $0x1c0] sm:$0xff] %v1793
        %1895 = vst.msk [vmem:[%s309 + $0x1c8] sm:$0xff] %vm1838, %v1794
        %1896 = vst [vmem:[%s309 + $0x1d0] sm:$0xff] %v1795
        %1897 = vst.msk [vmem:[%s309 + $0x1d8] sm:$0xff] %vm1838, %v1796
        %1898 = vst [vmem:[%s309 + $0x1e0] sm:$0xff] %v1797
        %1899 = vst.msk [vmem:[%s309 + $0x1e8] sm:$0xff] %vm1838, %v1798
        %1900 = vst [vmem:[%s309 + $0x1f0] sm:$0xff] %v1799
        %1901 = vst.msk [vmem:[%s309 + $0x1f8] sm:$0xff] %vm1838, %v1800
        %1902 = vst [vmem:[%s309 + $0x200] sm:$0xff] %v1801
        %1903 = vst.msk [vmem:[%s309 + $0x208] sm:$0xff] %vm1838, %v1802
        %1904 = vst [vmem:[%s309 + $0x210] sm:$0xff] %v1803
        %1905 = vst.msk [vmem:[%s309 + $0x218] sm:$0xff] %vm1838, %v1804
        %1906 = vst [vmem:[%s309 + $0x220] sm:$0xff] %v1805
        %1907 = vst.msk [vmem:[%s309 + $0x228] sm:$0xff] %vm1838, %v1806
        %1908 = vst [vmem:[%s309 + $0x230] sm:$0xff] %v1807
        %1909 = vst.msk [vmem:[%s309 + $0x238] sm:$0xff] %vm1838, %v1808
        %1910 = vst [vmem:[%s309 + $0x240] sm:$0xff] %v1809
        %1911 = vst.msk [vmem:[%s309 + $0x248] sm:$0xff] %vm1838, %v1810
        %1912 = vst [vmem:[%s309 + $0x250] sm:$0xff] %v1811
        %1913 = vst.msk [vmem:[%s309 + $0x258] sm:$0xff] %vm1838, %v1812
        %1914 = vst [vmem:[%s309 + $0x260] sm:$0xff] %v1813
        %1915 = vst.msk [vmem:[%s309 + $0x268] sm:$0xff] %vm1838, %v1814
        %1916 = vst [vmem:[%s309 + $0x270] sm:$0xff] %v1815
        %1917 = vst.msk [vmem:[%s309 + $0x278] sm:$0xff] %vm1838, %v1816
        %1918 = vst [vmem:[%s309 + $0x280] sm:$0xff] %v1817
        %1919 = vst.msk [vmem:[%s309 + $0x288] sm:$0xff] %vm1838, %v1818
        %1920 = vst [vmem:[%s309 + $0x290] sm:$0xff] %v1819
        %1921 = vst.msk [vmem:[%s309 + $0x298] sm:$0xff] %vm1838, %v1820
        %1922 = vst [vmem:[%s309 + $0x2a0] sm:$0xff] %v1821
        %1923 = vst.msk [vmem:[%s309 + $0x2a8] sm:$0xff] %vm1838, %v1822
        %1924 = vst [vmem:[%s309 + $0x2b0] sm:$0xff] %v1823
        %1925 = vst.msk [vmem:[%s309 + $0x2b8] sm:$0xff] %vm1838, %v1824
        %1926 = vst [vmem:[%s309 + $0x2c0] sm:$0xff] %v1825
        %1927 = vst.msk [vmem:[%s309 + $0x2c8] sm:$0xff] %vm1838, %v1826
        %1928 = vst [vmem:[%s309 + $0x2d0] sm:$0xff] %v1827
        %1929 = vst.msk [vmem:[%s309 + $0x2d8] sm:$0xff] %vm1838, %v1828
        %1930 = vst [vmem:[%s309 + $0x2e0] sm:$0xff] %v1829
        %1931 = vst.msk [vmem:[%s309 + $0x2e8] sm:$0xff] %vm1838, %v1830
        %1932 = vst [vmem:[%s309 + $0x2f0] sm:$0xff] %v1831
        %1933 = vst.msk [vmem:[%s309 + $0x2f8] sm:$0xff] %vm1838, %v1832
        %1934 = vst [vmem:[%s309 + $0x300] sm:$0xff] %v1833
        %1935 = vst.msk [vmem:[%s309 + $0x308] sm:$0xff] %vm1838, %v1834
        %1936 = vst [vmem:[%s309 + $0x310] sm:$0xff] %v1835
        %1937 = vst.msk [vmem:[%s309 + $0x318] sm:$0xff] %vm1838, %v1836
        %s1938 = smul.u32 50, %s26
        %p1939 = scmp.lt.s32.totalorder %s25, 1
        %s1940 = scalar_select %p1939, %s25, 1
        %p1941 = scmp.lt.s32.totalorder %s1938, 99
        %s1942 = scalar_select %p1941, %s1938, 99
        %s1943 = smul.addr %s1942, 2
        %s1944 = smul.addr %s1940, 200
        %s1945 = sadd.s32 %s1943, %s1944
        %s1946 = smul.addr %s1945, 8
        %s1947 = scalar_lea.vmem %s5, %s1946
        // Predicated region
        $region57: #{tpu_custom_call.1} parent=39 // pred_check
          %p1948 = pneg %p163
        $region58: #{tpu_custom_call.1} parent=39 // pred_check_branch
          %1950 = sbr.rel (%p1948) target = $region60
        $region59: #{tpu_custom_call.1} parent=39 // pred_region
          %s1951 = smul.u32 50, %s26
        $region60: #{tpu_custom_call.1} parent=39 // pred_fallthru
          _
      $region40: #{tpu_custom_call.1} parent=5 // pred_fallthru
        _
      %p1952 = scmp.le.s32.totalorder 2, %s16
      // Predicated region
      $region61: #{tpu_custom_call.1} parent=5 // pred_check
        %p1953 = pneg %p1952
      $region62: #{tpu_custom_call.1} parent=5 // pred_check_branch
        %1955 = sbr.rel (%p1953) target = $region64
      $region63: #{tpu_custom_call.1} parent=5 // pred_region
        %s1956 = ssub.s32 %s16, 2
        // Predicated region
        $region65: #{tpu_custom_call.1} parent=63 // pred_check
          %p1957 = pneg %p169
        $region66: #{tpu_custom_call.1} parent=63 // pred_check_branch
          %1959 = sbr.rel (%p1957) target = $region68
        $region67: #{tpu_custom_call.1} parent=63 // pred_region
          %s1960 = smul.u32 50, %s28
          %p1961 = scmp.lt.s32.totalorder %s27, 1
          %s1962 = scalar_select %p1961, %s27, 1
          %p1963 = scmp.lt.s32.totalorder %s1960, 99
          %s1964 = scalar_select %p1963, %s1960, 99
          %s1965 = smul.addr %s1964, 2
          %s1966 = smul.addr %s1962, 200
          %s1967 = sadd.s32 %s1965, %s1966
          %s1968 = smul.addr %s1967, 8
          %s1969 = scalar_lea.vmem %s5, %s1968
        $region68: #{tpu_custom_call.1} parent=63 // pred_fallthru
          _
      $region64: #{tpu_custom_call.1} parent=5 // pred_fallthru
        _
    $region6: #{tpu_custom_call.1} parent=1 // loop_footer
      %s20 = sadd.s32 1, %s16
    $region7: #{tpu_custom_call.1} parent=1 // loop_footer_branch
      %15 = sbr.rel target = $region3
    $region8: #{tpu_custom_call.1} parent=1 // loop_exit
      _
    %1970 = vsyncpa [#allocation5], 1
    %s1971 = scalar_lea.sflag [#allocation5], 1
    %1972 = vsyncpa %s1971, 1
    %1973 = vsyncpa [#allocation9], 1
    %1974 = vsyncpa [#allocation6], 1
    %s1975 = scalar_lea.sflag [#allocation6], 1
    %1976 = vsyncpa %s1975, 1

</llo_original>
